<compile_context>
chip_gen: v7x
topology: tpu7x:2x2x1
jax: 0.10.0
libtpu: 0.0.40
codegen_flags: <defaults>
</compile_context>

<pallas_src>
import jax
import jax.numpy as jnp
from jax.experimental import pallas as pl
from jax.experimental.pallas import tpu as pltpu


def _round_up(n, m):
    return (n + m - 1) // m * m


# ---------------------------------------------------------------------------
# The fused kernel: conv1 -> pool -> conv2 -> pool -> fc1 -> fc2 -> linear
# ---------------------------------------------------------------------------
def _lenet_fused_kernel(x_ref, t1_ref, c1b_ref, t2_ref, c2b_ref,
                        fw1_ref, fb1_ref, fw2_ref, fb2_ref, fw3_ref, fb3_ref,
                        o_ref):
    bn = x_ref.shape[1]                     # images per grid step
    x = x_ref[...]                          # (32, bn, 32) f32, layout (H, B, W)

    # ---- conv1 + bias + ReLU: ONE matmul against the width-Toeplitz weight.
    # rows = (oh, b); K = (kh, w') = 5*32; cols = (ow_parity, c_out, ow//2).
    xc = jnp.concatenate([x[i:i + 28] for i in range(5)], axis=-1)      # (28, bn, 160)
    xc = xc.reshape(28 * bn, 160).astype(jnp.bfloat16)
    a = jnp.dot(xc, t1_ref[...], preferred_element_type=jnp.float32)    # (28*bn, 168)
    a = jnp.maximum(a + c1b_ref[...], 0.0)
    # ---- 2x2/2 max-pool: rows via (oh -> oh//2, parity) regroup, cols via
    #      contiguous lane halves (parity-major Toeplitz column order).
    a = a.reshape(14, 2, bn, 168)
    a = jnp.maximum(a[:, 0], a[:, 1])                                   # (14, bn, 168)
    h1 = jnp.maximum(a[..., :84], a[..., 84:])                          # (14, bn, 84)

    # ---- conv2 + bias + ReLU (same trick; K = (kh, c_in, w') = 5*6*14), pool.
    xc2 = jnp.concatenate([h1[i:i + 10] for i in range(5)], axis=-1)    # (10, bn, 420)
    xc2 = xc2.reshape(10 * bn, 420).astype(jnp.bfloat16)
    a2 = jnp.dot(xc2, t2_ref[...], preferred_element_type=jnp.float32)  # (10*bn, 160)
    a2 = jnp.maximum(a2 + c2b_ref[...], 0.0)
    a2 = a2.reshape(5, 2, bn, 160)
    a2 = jnp.maximum(a2[:, 0], a2[:, 1])                                # (5, bn, 160)
    h2 = jnp.maximum(a2[..., :80], a2[..., 80:])                        # (5, bn, 80)

    # ---- flatten: lane concat over the 5 pooled rows (fc1 weights were
    #      permuted at trace time to this (h, c, w) feature order).
    feat = jnp.concatenate([h2[p] for p in range(5)], axis=-1)          # (bn, 400)

    # ---- fc1 -> ReLU -> fc2 -> ReLU -> linear, all intermediates in VMEM.
    z = jnp.dot(feat.astype(jnp.bfloat16), fw1_ref[...],
                preferred_element_type=jnp.float32) + fb1_ref[...]      # (bn, 128)
    z = jnp.maximum(z, 0.0)
    z = jnp.dot(z.astype(jnp.bfloat16), fw2_ref[...],
                preferred_element_type=jnp.float32) + fb2_ref[...]      # (bn, 128)
    z = jnp.maximum(z, 0.0)
    y = jnp.dot(z.astype(jnp.bfloat16), fw3_ref[...],
                preferred_element_type=jnp.float32) + fb3_ref[...]      # (bn, nc)
    o_ref[...] = y.astype(o_ref.dtype)


# ---------------------------------------------------------------------------
# Trace-time weight packing (tiny tensors; pure XLA, outside the kernel)
# ---------------------------------------------------------------------------
def _prep_operands(params):
    f32, bf16 = jnp.float32, jnp.bfloat16

    kw = jnp.arange(5)[:, None, None, None]            # kernel-column index
    par = jnp.arange(2)[None, None, :, None]            # output-width parity

    # conv1 -> width-Toeplitz (160, 168).
    # rows: (kh, w') w' in [0,32); cols: (ow_parity, c_out, ow//2) so that the
    # width half of the 2x2 pool is a contiguous 84-lane half-vs-half max.
    w1 = params["conv1_w"][:, 0].astype(f32)            # (6, 5, 5)  [c, kh, kw]
    wp = jnp.arange(32)[None, :, None, None]
    q1 = jnp.arange(14)[None, None, None, :]
    sel1 = (wp - 2 * q1 - par == kw).astype(f32)         # (5, 32, 2, 14)
    t1 = jnp.einsum("cij,jwpq->iwpcq", w1, sel1).reshape(160, 168).astype(bf16)
    c1b = jnp.tile(jnp.repeat(params["conv1_b"].astype(f32), 14), 2).reshape(1, 168)

    # conv2 -> width-Toeplitz (420, 160).
    # rows: (kh, c_in, w') w' in [0,14); cols: (ow_parity, c_out, ow//2).
    w2 = params["conv2_w"].astype(f32)                   # (16, 6, 5, 5) [o, a, kh, kw]
    wp2 = jnp.arange(14)[None, :, None, None]
    q2 = jnp.arange(5)[None, None, None, :]
    sel2 = (wp2 - 2 * q2 - par == kw).astype(f32)         # (5, 14, 2, 5)
    t2 = jnp.einsum("oaij,jwpq->iawpoq", w2, sel2).reshape(420, 160).astype(bf16)
    c2b = jnp.tile(jnp.repeat(params["conv2_b"].astype(f32), 5), 2).reshape(1, 160)

    # fc stack: permute fc1's input dim from torch's (c, h, w) flatten order to
    # the kernel's (h, c, w) lane-concat order; zero-pad 120->128 and 84->128.
    nc = params["lin_w"].shape[0]
    wfc1 = params["fc1_w"].reshape(120, 16, 5, 5).transpose(0, 2, 1, 3).reshape(120, 400)
    fw1 = jnp.pad(wfc1.T, ((0, 0), (0, 8))).astype(bf16)                 # (400, 128)
    fb1 = jnp.pad(params["fc1_b"].astype(f32), (0, 8)).reshape(1, 128)
    fw2 = jnp.pad(params["fc2_w"].T, ((0, 8), (0, 44))).astype(bf16)     # (128, 128)
    fb2 = jnp.pad(params["fc2_b"].astype(f32), (0, 44)).reshape(1, 128)
    fw3 = jnp.pad(params["lin_w"].T, ((0, 44), (0, 0))).astype(bf16)     # (128, nc)
    fb3 = params["lin_b"].astype(f32).reshape(1, nc)

    return (t1, c1b, t2, c2b, fw1, fb1, fw2, fb2, fw3, fb3), nc


# ---------------------------------------------------------------------------
# Forward pass (PyTorch LeNet.forward semantics)
# ---------------------------------------------------------------------------
def lenet_forward(params, x, *, block_n=32):
    """x: (N, 1, 32, 32) f32 NCHW.  Returns (N, num_classes) f32 logits."""
    N, cin, H, W = x.shape
    assert (cin, H, W) == (1, 32, 32), "LeNet expects (N, 1, 32, 32) inputs"

    ops, nc = _prep_operands(params)
    t1, c1b, t2, c2b, fw1, fb1, fw2, fb2, fw3, fb3 = ops

    # Batch tile: multiple of 8 (sublane tile) so every block satisfies the
    # (8, 128) rule; 32 gives >=2 parallel grid steps (both v7x TCs) for N>=64
    # while keeping per-step VMEM well under the 32 MiB scoped limit.
    bn = _round_up(min(block_n, N), 8)
    n_pad = _round_up(N, bn)

    xs = x[:, 0]                                              # (N, 32, 32)
    if n_pad != N:
        xs = jnp.pad(xs, ((0, n_pad - N), (0, 0), (0, 0)))
    # (H, batch, W): conv row offsets and row pooling act on an untiled leading
    # dim; the batch sits on sublanes, W (32 lanes) is the matmul K fragment.
    x_hbw = jnp.transpose(xs, (1, 0, 2))                      # (32, n_pad, 32)

    grid = (n_pad // bn,)
    wspec = lambda a: pl.BlockSpec(a.shape, lambda n: (0, 0))

    flops = 2 * n_pad * (28 * 160 * 168 + 10 * 420 * 160
                         + 400 * 128 + 128 * 128 + 128 * nc)
    weight_bytes = sum(int(a.size) * a.dtype.itemsize for a in ops)
    bytes_accessed = 4 * n_pad * (32 * 32 + nc) + weight_bytes

    out = pl.pallas_call(
        _lenet_fused_kernel,
        out_shape=jax.ShapeDtypeStruct((n_pad, nc), jnp.float32),
        grid=grid,
        in_specs=[
            pl.BlockSpec((32, bn, 32), lambda n: (0, n, 0)),
            wspec(t1), wspec(c1b), wspec(t2), wspec(c2b),
            wspec(fw1), wspec(fb1), wspec(fw2), wspec(fb2),
            wspec(fw3), wspec(fb3),
        ],
        out_specs=pl.BlockSpec((bn, nc), lambda n: (n, 0)),
        compiler_params=pltpu.CompilerParams(
            dimension_semantics=("parallel",),
            vmem_limit_bytes=32 * 1024 * 1024,
        ),
        cost_estimate=pl.CostEstimate(
            flops=flops, transcendentals=0, bytes_accessed=bytes_accessed),
    )(x_hbw, t1, c1b, t2, c2b, fw1, fb1, fw2, fb2, fw3, fb3)
    return out[:N]


# ---------------------------------------------------------------------------
# Parameters (PyTorch layouts) and demo
# ---------------------------------------------------------------------------
def init_params(key, num_classes=10):
    ks = jax.random.split(key, 10)
    n = jax.random.normal
    return {
        "conv1_w": n(ks[0], (6, 1, 5, 5), jnp.float32) * 0.2,
        "conv1_b": n(ks[1], (6,), jnp.float32) * 0.1,
        "conv2_w": n(ks[2], (16, 6, 5, 5), jnp.float32) * 0.08,
        "conv2_b": n(ks[3], (16,), jnp.float32) * 0.1,
        "fc1_w": n(ks[4], (120, 400), jnp.float32) * 0.05,   # (out, in) like torch
        "fc1_b": n(ks[5], (120,), jnp.float32) * 0.1,
        "fc2_w": n(ks[6], (84, 120), jnp.float32) * 0.09,
        "fc2_b": n(ks[7], (84,), jnp.float32) * 0.1,
        "lin_w": n(ks[8], (num_classes, 84), jnp.float32) * 0.1,
        "lin_b": n(ks[9], (num_classes,), jnp.float32) * 0.1,
    }


if __name__ == "__main__":
    key = jax.random.PRNGKey(0)
    k_params, k_x = jax.random.split(key)
    params = init_params(k_params, num_classes=10)
    # LeNet requires 32x32 single-channel input (fc1 expects 16*5*5 = 400).
    x = jax.random.normal(k_x, (2, 1, 32, 32), jnp.float32)

    y = jax.jit(lenet_forward)(params, x)
    y = jax.block_until_ready(y)
    assert y.shape == (2, 10) and y.dtype == jnp.float32
    assert bool(jnp.all(jnp.isfinite(y)))
    print("KERNEL_OK")
</pallas_src>

<mosaic_0001>
module attributes {stable_mosaic.version = 11 : i64} {
  func.func @_lenet_fused_kernel(%arg0: i32, %arg1: memref<32x8x32xf32, #tpu.memory_space<vmem>>, %arg2: memref<160x168xbf16, #tpu.memory_space<vmem>>, %arg3: memref<1x168xf32, #tpu.memory_space<vmem>>, %arg4: memref<420x160xbf16, #tpu.memory_space<vmem>>, %arg5: memref<1x160xf32, #tpu.memory_space<vmem>>, %arg6: memref<400x128xbf16, #tpu.memory_space<vmem>>, %arg7: memref<1x128xf32, #tpu.memory_space<vmem>>, %arg8: memref<128x128xbf16, #tpu.memory_space<vmem>>, %arg9: memref<1x128xf32, #tpu.memory_space<vmem>>, %arg10: memref<128x10xbf16, #tpu.memory_space<vmem>>, %arg11: memref<1x10xf32, #tpu.memory_space<vmem>>, %arg12: memref<8x10xf32, #tpu.memory_space<vmem>>) attributes {dimension_semantics = [#tpu.dimension_semantics<parallel>], iteration_bounds = array<i64: 1>, scalar_prefetch = 0 : i64, scratch_operands = 0 : i64, tpu.core_type = #tpu.core_type<tc>, window_params = [{transform_indices = @transform_0, window_bounds = array<i64: 32, 8, 32>}, {pipeline_mode = #tpu.pipeline_mode<synchronous>, transform_indices = @transform_1, window_bounds = array<i64: 160, 168>}, {pipeline_mode = #tpu.pipeline_mode<synchronous>, transform_indices = @transform_2, window_bounds = array<i64: 1, 168>}, {pipeline_mode = #tpu.pipeline_mode<synchronous>, transform_indices = @transform_3, window_bounds = array<i64: 420, 160>}, {pipeline_mode = #tpu.pipeline_mode<synchronous>, transform_indices = @transform_4, window_bounds = array<i64: 1, 160>}, {pipeline_mode = #tpu.pipeline_mode<synchronous>, transform_indices = @transform_5, window_bounds = array<i64: 400, 128>}, {pipeline_mode = #tpu.pipeline_mode<synchronous>, transform_indices = @transform_6, window_bounds = array<i64: 1, 128>}, {pipeline_mode = #tpu.pipeline_mode<synchronous>, transform_indices = @transform_7, window_bounds = array<i64: 128, 128>}, {pipeline_mode = #tpu.pipeline_mode<synchronous>, transform_indices = @transform_8, window_bounds = array<i64: 1, 128>}, {pipeline_mode = #tpu.pipeline_mode<synchronous>, transform_indices = @transform_9, window_bounds = array<i64: 128, 10>}, {pipeline_mode = #tpu.pipeline_mode<synchronous>, transform_indices = @transform_10, window_bounds = array<i64: 1, 10>}, {transform_indices = @transform_11, window_bounds = array<i64: 8, 10>}]} {
    %c0 = arith.constant 0 : index
    %c0_0 = arith.constant 0 : index
    %c0_1 = arith.constant 0 : index
    %0 = vector.load %arg1[%c0, %c0_0, %c0_1] : memref<32x8x32xf32, #tpu.memory_space<vmem>>, vector<32x8x32xf32>
    %1 = vector.extract_strided_slice %0 {offsets = [0, 0, 0], sizes = [28, 8, 32], strides = [1, 1, 1]} : vector<32x8x32xf32> to vector<28x8x32xf32>
    %2 = vector.extract_strided_slice %0 {offsets = [1, 0, 0], sizes = [28, 8, 32], strides = [1, 1, 1]} : vector<32x8x32xf32> to vector<28x8x32xf32>
    %3 = vector.extract_strided_slice %0 {offsets = [2, 0, 0], sizes = [28, 8, 32], strides = [1, 1, 1]} : vector<32x8x32xf32> to vector<28x8x32xf32>
    %4 = vector.extract_strided_slice %0 {offsets = [3, 0, 0], sizes = [28, 8, 32], strides = [1, 1, 1]} : vector<32x8x32xf32> to vector<28x8x32xf32>
    %5 = vector.extract_strided_slice %0 {offsets = [4, 0, 0], sizes = [28, 8, 32], strides = [1, 1, 1]} : vector<32x8x32xf32> to vector<28x8x32xf32>
    %6 = tpu.concatenate %1, %2, %3, %4, %5 in 2 : vector<28x8x32xf32>, vector<28x8x32xf32>, vector<28x8x32xf32>, vector<28x8x32xf32>, vector<28x8x32xf32> -> vector<28x8x160xf32>
    %7 = vector.shape_cast %6 : vector<28x8x160xf32> to vector<224x160xf32>
    %8 = arith.truncf %7 : vector<224x160xf32> to vector<224x160xbf16>
    %c0_2 = arith.constant 0 : index
    %c0_3 = arith.constant 0 : index
    %9 = vector.load %arg2[%c0_2, %c0_3] : memref<160x168xbf16, #tpu.memory_space<vmem>>, vector<160x168xbf16>
    %cst = arith.constant dense<0.000000e+00> : vector<224x168xf32>
    %10 = tpu.matmul %8, %9, %cst {dimension_numbers = #tpu.dot_dimension_numbers<[1], [0], [0], [1], [0, 0, 1, 1], [], []>} : vector<224x160xbf16>, vector<160x168xbf16>, vector<224x168xf32> -> vector<224x168xf32>
    %c0_4 = arith.constant 0 : index
    %c0_5 = arith.constant 0 : index
    %11 = vector.load %arg3[%c0_4, %c0_5] : memref<1x168xf32, #tpu.memory_space<vmem>>, vector<1x168xf32>
    %12 = vector.broadcast %11 : vector<1x168xf32> to vector<224x168xf32>
    %13 = arith.addf %10, %12 : vector<224x168xf32>
    %cst_6 = arith.constant 0.000000e+00 : f32
    %14 = vector.broadcast %cst_6 : f32 to vector<224x168xf32>
    %15 = arith.maximumf %13, %14 : vector<224x168xf32>
    %16 = vector.shape_cast %15 : vector<224x168xf32> to vector<14x2x8x168xf32>
    %17 = vector.extract_strided_slice %16 {offsets = [0, 0, 0, 0], sizes = [14, 1, 8, 168], strides = [1, 1, 1, 1]} : vector<14x2x8x168xf32> to vector<14x1x8x168xf32>
    %18 = vector.shape_cast %17 : vector<14x1x8x168xf32> to vector<14x8x168xf32>
    %19 = vector.extract_strided_slice %16 {offsets = [0, 1, 0, 0], sizes = [14, 1, 8, 168], strides = [1, 1, 1, 1]} : vector<14x2x8x168xf32> to vector<14x1x8x168xf32>
    %20 = vector.shape_cast %19 : vector<14x1x8x168xf32> to vector<14x8x168xf32>
    %21 = arith.maximumf %18, %20 : vector<14x8x168xf32>
    %22 = vector.extract_strided_slice %21 {offsets = [0, 0, 0], sizes = [14, 8, 84], strides = [1, 1, 1]} : vector<14x8x168xf32> to vector<14x8x84xf32>
    %23 = vector.extract_strided_slice %21 {offsets = [0, 0, 84], sizes = [14, 8, 84], strides = [1, 1, 1]} : vector<14x8x168xf32> to vector<14x8x84xf32>
    %24 = arith.maximumf %22, %23 : vector<14x8x84xf32>
    %25 = vector.extract_strided_slice %24 {offsets = [0, 0, 0], sizes = [10, 8, 84], strides = [1, 1, 1]} : vector<14x8x84xf32> to vector<10x8x84xf32>
    %26 = vector.extract_strided_slice %24 {offsets = [1, 0, 0], sizes = [10, 8, 84], strides = [1, 1, 1]} : vector<14x8x84xf32> to vector<10x8x84xf32>
    %27 = vector.extract_strided_slice %24 {offsets = [2, 0, 0], sizes = [10, 8, 84], strides = [1, 1, 1]} : vector<14x8x84xf32> to vector<10x8x84xf32>
    %28 = vector.extract_strided_slice %24 {offsets = [3, 0, 0], sizes = [10, 8, 84], strides = [1, 1, 1]} : vector<14x8x84xf32> to vector<10x8x84xf32>
    %29 = vector.extract_strided_slice %24 {offsets = [4, 0, 0], sizes = [10, 8, 84], strides = [1, 1, 1]} : vector<14x8x84xf32> to vector<10x8x84xf32>
    %30 = tpu.concatenate %25, %26, %27, %28, %29 in 2 : vector<10x8x84xf32>, vector<10x8x84xf32>, vector<10x8x84xf32>, vector<10x8x84xf32>, vector<10x8x84xf32> -> vector<10x8x420xf32>
    %31 = vector.shape_cast %30 : vector<10x8x420xf32> to vector<80x420xf32>
    %32 = arith.truncf %31 : vector<80x420xf32> to vector<80x420xbf16>
    %c0_7 = arith.constant 0 : index
    %c0_8 = arith.constant 0 : index
    %33 = vector.load %arg4[%c0_7, %c0_8] : memref<420x160xbf16, #tpu.memory_space<vmem>>, vector<420x160xbf16>
    %cst_9 = arith.constant dense<0.000000e+00> : vector<80x160xf32>
    %34 = tpu.matmul %32, %33, %cst_9 {dimension_numbers = #tpu.dot_dimension_numbers<[1], [0], [0], [1], [0, 0, 1, 1], [], []>} : vector<80x420xbf16>, vector<420x160xbf16>, vector<80x160xf32> -> vector<80x160xf32>
    %c0_10 = arith.constant 0 : index
    %c0_11 = arith.constant 0 : index
    %35 = vector.load %arg5[%c0_10, %c0_11] : memref<1x160xf32, #tpu.memory_space<vmem>>, vector<1x160xf32>
    %36 = vector.broadcast %35 : vector<1x160xf32> to vector<80x160xf32>
    %37 = arith.addf %34, %36 : vector<80x160xf32>
    %cst_12 = arith.constant 0.000000e+00 : f32
    %38 = vector.broadcast %cst_12 : f32 to vector<80x160xf32>
    %39 = arith.maximumf %37, %38 : vector<80x160xf32>
    %40 = vector.shape_cast %39 : vector<80x160xf32> to vector<5x2x8x160xf32>
    %41 = vector.extract_strided_slice %40 {offsets = [0, 0, 0, 0], sizes = [5, 1, 8, 160], strides = [1, 1, 1, 1]} : vector<5x2x8x160xf32> to vector<5x1x8x160xf32>
    %42 = vector.shape_cast %41 : vector<5x1x8x160xf32> to vector<5x8x160xf32>
    %43 = vector.extract_strided_slice %40 {offsets = [0, 1, 0, 0], sizes = [5, 1, 8, 160], strides = [1, 1, 1, 1]} : vector<5x2x8x160xf32> to vector<5x1x8x160xf32>
    %44 = vector.shape_cast %43 : vector<5x1x8x160xf32> to vector<5x8x160xf32>
    %45 = arith.maximumf %42, %44 : vector<5x8x160xf32>
    %46 = vector.extract_strided_slice %45 {offsets = [0, 0, 0], sizes = [5, 8, 80], strides = [1, 1, 1]} : vector<5x8x160xf32> to vector<5x8x80xf32>
    %47 = vector.extract_strided_slice %45 {offsets = [0, 0, 80], sizes = [5, 8, 80], strides = [1, 1, 1]} : vector<5x8x160xf32> to vector<5x8x80xf32>
    %48 = arith.maximumf %46, %47 : vector<5x8x80xf32>
    %49 = vector.extract_strided_slice %48 {offsets = [0, 0, 0], sizes = [1, 8, 80], strides = [1, 1, 1]} : vector<5x8x80xf32> to vector<1x8x80xf32>
    %50 = vector.shape_cast %49 : vector<1x8x80xf32> to vector<8x80xf32>
    %51 = vector.extract_strided_slice %48 {offsets = [1, 0, 0], sizes = [1, 8, 80], strides = [1, 1, 1]} : vector<5x8x80xf32> to vector<1x8x80xf32>
    %52 = vector.shape_cast %51 : vector<1x8x80xf32> to vector<8x80xf32>
    %53 = vector.extract_strided_slice %48 {offsets = [2, 0, 0], sizes = [1, 8, 80], strides = [1, 1, 1]} : vector<5x8x80xf32> to vector<1x8x80xf32>
    %54 = vector.shape_cast %53 : vector<1x8x80xf32> to vector<8x80xf32>
    %55 = vector.extract_strided_slice %48 {offsets = [3, 0, 0], sizes = [1, 8, 80], strides = [1, 1, 1]} : vector<5x8x80xf32> to vector<1x8x80xf32>
    %56 = vector.shape_cast %55 : vector<1x8x80xf32> to vector<8x80xf32>
    %57 = vector.extract_strided_slice %48 {offsets = [4, 0, 0], sizes = [1, 8, 80], strides = [1, 1, 1]} : vector<5x8x80xf32> to vector<1x8x80xf32>
    %58 = vector.shape_cast %57 : vector<1x8x80xf32> to vector<8x80xf32>
    %59 = tpu.concatenate %50, %52, %54, %56, %58 in 1 : vector<8x80xf32>, vector<8x80xf32>, vector<8x80xf32>, vector<8x80xf32>, vector<8x80xf32> -> vector<8x400xf32>
    %60 = arith.truncf %59 : vector<8x400xf32> to vector<8x400xbf16>
    %c0_13 = arith.constant 0 : index
    %c0_14 = arith.constant 0 : index
    %61 = vector.load %arg6[%c0_13, %c0_14] : memref<400x128xbf16, #tpu.memory_space<vmem>>, vector<400x128xbf16>
    %cst_15 = arith.constant dense<0.000000e+00> : vector<8x128xf32>
    %62 = tpu.matmul %60, %61, %cst_15 {dimension_numbers = #tpu.dot_dimension_numbers<[1], [0], [0], [1], [0, 0, 1, 1], [], []>} : vector<8x400xbf16>, vector<400x128xbf16>, vector<8x128xf32> -> vector<8x128xf32>
    %c0_16 = arith.constant 0 : index
    %c0_17 = arith.constant 0 : index
    %63 = vector.load %arg7[%c0_16, %c0_17] : memref<1x128xf32, #tpu.memory_space<vmem>>, vector<1x128xf32>
    %64 = vector.broadcast %63 : vector<1x128xf32> to vector<8x128xf32>
    %65 = arith.addf %62, %64 : vector<8x128xf32>
    %cst_18 = arith.constant 0.000000e+00 : f32
    %66 = vector.broadcast %cst_18 : f32 to vector<8x128xf32>
    %67 = arith.maximumf %65, %66 : vector<8x128xf32>
    %68 = arith.truncf %67 : vector<8x128xf32> to vector<8x128xbf16>
    %c0_19 = arith.constant 0 : index
    %c0_20 = arith.constant 0 : index
    %69 = vector.load %arg8[%c0_19, %c0_20] : memref<128x128xbf16, #tpu.memory_space<vmem>>, vector<128x128xbf16>
    %cst_21 = arith.constant dense<0.000000e+00> : vector<8x128xf32>
    %70 = tpu.matmul %68, %69, %cst_21 {dimension_numbers = #tpu.dot_dimension_numbers<[1], [0], [0], [1], [0, 0, 1, 1], [], []>} : vector<8x128xbf16>, vector<128x128xbf16>, vector<8x128xf32> -> vector<8x128xf32>
    %c0_22 = arith.constant 0 : index
    %c0_23 = arith.constant 0 : index
    %71 = vector.load %arg9[%c0_22, %c0_23] : memref<1x128xf32, #tpu.memory_space<vmem>>, vector<1x128xf32>
    %72 = vector.broadcast %71 : vector<1x128xf32> to vector<8x128xf32>
    %73 = arith.addf %70, %72 : vector<8x128xf32>
    %cst_24 = arith.constant 0.000000e+00 : f32
    %74 = vector.broadcast %cst_24 : f32 to vector<8x128xf32>
    %75 = arith.maximumf %73, %74 : vector<8x128xf32>
    %76 = arith.truncf %75 : vector<8x128xf32> to vector<8x128xbf16>
    %c0_25 = arith.constant 0 : index
    %c0_26 = arith.constant 0 : index
    %77 = vector.load %arg10[%c0_25, %c0_26] : memref<128x10xbf16, #tpu.memory_space<vmem>>, vector<128x10xbf16>
    %cst_27 = arith.constant dense<0.000000e+00> : vector<8x10xf32>
    %78 = tpu.matmul %76, %77, %cst_27 {dimension_numbers = #tpu.dot_dimension_numbers<[1], [0], [0], [1], [0, 0, 1, 1], [], []>} : vector<8x128xbf16>, vector<128x10xbf16>, vector<8x10xf32> -> vector<8x10xf32>
    %c0_28 = arith.constant 0 : index
    %c0_29 = arith.constant 0 : index
    %79 = vector.load %arg11[%c0_28, %c0_29] : memref<1x10xf32, #tpu.memory_space<vmem>>, vector<1x10xf32>
    %80 = vector.broadcast %79 : vector<1x10xf32> to vector<8x10xf32>
    %81 = arith.addf %78, %80 : vector<8x10xf32>
    %c0_30 = arith.constant 0 : index
    %c0_31 = arith.constant 0 : index
    %82 = vector.load %arg12[%c0_30, %c0_31] : memref<8x10xf32, #tpu.memory_space<vmem>>, vector<8x10xf32>
    tpu.vector_store %arg12[%c0_30, %c0_31], %81 {strides = array<i32>} : memref<8x10xf32, #tpu.memory_space<vmem>>, vector<8x10xf32>,
    return
  }
  func.func @transform_0(%arg0: i32) -> (i32, i32, i32) {
    %c0_i32 = arith.constant 0 : i32
    %c0_i32_0 = arith.constant 0 : i32
    %c0_i32_1 = arith.constant 0 : i32
    return %c0_i32, %arg0, %c0_i32_0 : i32, i32, i32
  }
  func.func @transform_1(%arg0: i32) -> (i32, i32) {
    %c0_i32 = arith.constant 0 : i32
    %c0_i32_0 = arith.constant 0 : i32
    %c0_i32_1 = arith.constant 0 : i32
    return %c0_i32, %c0_i32_0 : i32, i32
  }
  func.func @transform_2(%arg0: i32) -> (i32, i32) {
    %c0_i32 = arith.constant 0 : i32
    %c0_i32_0 = arith.constant 0 : i32
    %c0_i32_1 = arith.constant 0 : i32
    return %c0_i32, %c0_i32_0 : i32, i32
  }
  func.func @transform_3(%arg0: i32) -> (i32, i32) {
    %c0_i32 = arith.constant 0 : i32
    %c0_i32_0 = arith.constant 0 : i32
    %c0_i32_1 = arith.constant 0 : i32
    return %c0_i32, %c0_i32_0 : i32, i32
  }
  func.func @transform_4(%arg0: i32) -> (i32, i32) {
    %c0_i32 = arith.constant 0 : i32
    %c0_i32_0 = arith.constant 0 : i32
    %c0_i32_1 = arith.constant 0 : i32
    return %c0_i32, %c0_i32_0 : i32, i32
  }
  func.func @transform_5(%arg0: i32) -> (i32, i32) {
    %c0_i32 = arith.constant 0 : i32
    %c0_i32_0 = arith.constant 0 : i32
    %c0_i32_1 = arith.constant 0 : i32
    return %c0_i32, %c0_i32_0 : i32, i32
  }
  func.func @transform_6(%arg0: i32) -> (i32, i32) {
    %c0_i32 = arith.constant 0 : i32
    %c0_i32_0 = arith.constant 0 : i32
    %c0_i32_1 = arith.constant 0 : i32
    return %c0_i32, %c0_i32_0 : i32, i32
  }
  func.func @transform_7(%arg0: i32) -> (i32, i32) {
    %c0_i32 = arith.constant 0 : i32
    %c0_i32_0 = arith.constant 0 : i32
    %c0_i32_1 = arith.constant 0 : i32
    return %c0_i32, %c0_i32_0 : i32, i32
  }
  func.func @transform_8(%arg0: i32) -> (i32, i32) {
    %c0_i32 = arith.constant 0 : i32
    %c0_i32_0 = arith.constant 0 : i32
    %c0_i32_1 = arith.constant 0 : i32
    return %c0_i32, %c0_i32_0 : i32, i32
  }
  func.func @transform_9(%arg0: i32) -> (i32, i32) {
    %c0_i32 = arith.constant 0 : i32
    %c0_i32_0 = arith.constant 0 : i32
    %c0_i32_1 = arith.constant 0 : i32
    return %c0_i32, %c0_i32_0 : i32, i32
  }
  func.func @transform_10(%arg0: i32) -> (i32, i32) {
    %c0_i32 = arith.constant 0 : i32
    %c0_i32_0 = arith.constant 0 : i32
    %c0_i32_1 = arith.constant 0 : i32
    return %c0_i32, %c0_i32_0 : i32, i32
  }
  func.func @transform_11(%arg0: i32) -> (i32, i32) {
    %c0_i32 = arith.constant 0 : i32
    %c0_i32_0 = arith.constant 0 : i32
    return %arg0, %c0_i32 : i32, i32
  }
}

</mosaic_0001>

<llo_original>
// kernel: tile.13
$region0: #{tile.13}
  %s0 = inlined_call_operand.vmem [shape: f32[16,5], index: 0, kind: input, shape index: {}]
  %s1 = inlined_call_operand.vmem [shape: f32[80], index: 1, kind: output, shape index: {}]
  $region1: #{tile.13} parent=0
    #allocation0 [shape = 'u8[4096]{0}', space=vmem, size = 0x1000, scoped, tag = 'scoped mem for output reshape']
    %v2 = vld [vmem:[%s0] sm:$0x1]
    %vm3 = vcmask 39936
    %4 = vst.msk [vmem:[#allocation0] sm:$0x1] %vm3, %v2
    %s5 = scalar_lea.vmem %s0, 15
    %v6 = vld [vmem:[%s5] sm:$0x1]
    %7 = vrot.lane.b32.xlu0 %v6, 75
    %v8 = vpop.permute.xlu0 %7
    %vm9 = vcmask 654936
    %10 = vst.msk [vmem:[#allocation0] sm:$0x1] %vm9, %v8
    %s11 = scalar_lea.vmem %s0, 14
    %v12 = vld [vmem:[%s11] sm:$0x1]
    %13 = vrot.lane.b32.xlu0 %v12, 70
    %v14 = vpop.permute.xlu0 %13
    %vm15 = vcmask 613936
    %16 = vst.msk [vmem:[#allocation0] sm:$0x1] %vm15, %v14
    %s17 = scalar_lea.vmem %s0, 13
    %v18 = vld [vmem:[%s17] sm:$0x1]
    %19 = vrot.lane.b32.xlu0 %v18, 65
    %v20 = vpop.permute.xlu0 %19
    %vm21 = vcmask 572936
    %22 = vst.msk [vmem:[#allocation0] sm:$0x1] %vm21, %v20
    %s23 = scalar_lea.vmem %s0, 12
    %v24 = vld [vmem:[%s23] sm:$0x1]
    %25 = vrot.lane.b32.xlu0 %v24, 60
    %v26 = vpop.permute.xlu0 %25
    %vm27 = vcmask 531936
    %28 = vst.msk [vmem:[#allocation0] sm:$0x1] %vm27, %v26
    %s29 = scalar_lea.vmem %s0, 11
    %v30 = vld [vmem:[%s29] sm:$0x1]
    %31 = vrot.lane.b32.xlu0 %v30, 55
    %v32 = vpop.permute.xlu0 %31
    %vm33 = vcmask 490936
    %34 = vst.msk [vmem:[#allocation0] sm:$0x1] %vm33, %v32
    %s35 = scalar_lea.vmem %s0, 10
    %v36 = vld [vmem:[%s35] sm:$0x1]
    %37 = vrot.lane.b32.xlu0 %v36, 50
    %v38 = vpop.permute.xlu0 %37
    %vm39 = vcmask 449936
    %40 = vst.msk [vmem:[#allocation0] sm:$0x1] %vm39, %v38
    %s41 = scalar_lea.vmem %s0, 9
    %v42 = vld [vmem:[%s41] sm:$0x1]
    %43 = vrot.lane.b32.xlu0 %v42, 45
    %v44 = vpop.permute.xlu0 %43
    %vm45 = vcmask 408936
    %46 = vst.msk [vmem:[#allocation0] sm:$0x1] %vm45, %v44
    %s47 = scalar_lea.vmem %s0, 8
    %v48 = vld [vmem:[%s47] sm:$0x1]
    %49 = vrot.lane.b32.xlu0 %v48, 40
    %v50 = vpop.permute.xlu0 %49
    %vm51 = vcmask 367936
    %52 = vst.msk [vmem:[#allocation0] sm:$0x1] %vm51, %v50
    %s53 = scalar_lea.vmem %s0, 7
    %v54 = vld [vmem:[%s53] sm:$0x1]
    %55 = vrot.lane.b32.xlu0 %v54, 35
    %v56 = vpop.permute.xlu0 %55
    %vm57 = vcmask 326936
    %58 = vst.msk [vmem:[#allocation0] sm:$0x1] %vm57, %v56
    %s59 = scalar_lea.vmem %s0, 6
    %v60 = vld [vmem:[%s59] sm:$0x1]
    %61 = vrot.lane.b32.xlu0 %v60, 30
    %v62 = vpop.permute.xlu0 %61
    %vm63 = vcmask 285936
    %64 = vst.msk [vmem:[#allocation0] sm:$0x1] %vm63, %v62
    %s65 = scalar_lea.vmem %s0, 5
    %v66 = vld [vmem:[%s65] sm:$0x1]
    %67 = vrot.lane.b32.xlu0 %v66, 25
    %v68 = vpop.permute.xlu0 %67
    %vm69 = vcmask 244936
    %70 = vst.msk [vmem:[#allocation0] sm:$0x1] %vm69, %v68
    %s71 = scalar_lea.vmem %s0, 4
    %v72 = vld [vmem:[%s71] sm:$0x1]
    %73 = vrot.lane.b32.xlu0 %v72, 20
    %v74 = vpop.permute.xlu0 %73
    %vm75 = vcmask 203936
    %76 = vst.msk [vmem:[#allocation0] sm:$0x1] %vm75, %v74
    %s77 = scalar_lea.vmem %s0, 3
    %v78 = vld [vmem:[%s77] sm:$0x1]
    %79 = vrot.lane.b32.xlu0 %v78, 15
    %v80 = vpop.permute.xlu0 %79
    %vm81 = vcmask 162936
    %82 = vst.msk [vmem:[#allocation0] sm:$0x1] %vm81, %v80
    %s83 = scalar_lea.vmem %s0, 2
    %v84 = vld [vmem:[%s83] sm:$0x1]
    %85 = vrot.lane.b32.xlu0 %v84, 10
    %v86 = vpop.permute.xlu0 %85
    %vm87 = vcmask 121936
    %88 = vst.msk [vmem:[#allocation0] sm:$0x1] %vm87, %v86
    %s89 = scalar_lea.vmem %s0, 1
    %v90 = vld [vmem:[%s89] sm:$0x1]
    %91 = vrot.lane.b32.xlu0 %v90, 5
    %v92 = vpop.permute.xlu0 %91
    %vm93 = vcmask 80936
    %94 = vst.msk [vmem:[#allocation0] sm:$0x1] %vm93, %v92
    %s96 = sshllo.u32 0, 1
    %v98 = vld [vmem:[#allocation0] sm:%s96]
    %s99 = sshllo.u32 0, 1
    %100 = vst [vmem:[%s1] sm:%s99] %v98

// kernel: tile.14
$region0: #{tile.14}
  #allocation0 [shape = 's32[1]{0}', space=sflag, size = 0x4, scoped, tag = 'scoped memory for tile.14']
  %s0 = inlined_call_operand.vmem [shape: f32[80], index: 0, kind: input, shape index: {}]
  %s1 = inlined_call_operand.vmem [shape: f32[2,80], index: 1, kind: output, shape index: {}]
  // Predicated region
  $region2: #{tile.14} parent=0 // pred_check
    _
  $region3: #{tile.14} parent=0 // pred_check_branch
    %3 = sbr.rel (0) target = $region5
  $region4: #{tile.14} parent=0 // pred_region
    _
  $region5: #{tile.14} parent=0 // pred_fallthru
    _
  %v4 = vld [vmem:[%s0] ss:$0 sm:$0xff]
  %5 = vst [vmem:[%s1] sm:$0x3] %v4

// kernel: tile.15
$region0: #{tile.15}
  %s0 = inlined_call_operand.vmem [shape: f32[2,80], index: 0, kind: input, shape index: {}]
  %s1 = inlined_call_operand.vmem [shape: f32[1,160], index: 1, kind: output, shape index: {}]
  $region1: #{tile.15} parent=0
    #allocation0 [shape = 'u8[8192]{0}', space=vmem, size = 0x2000, scoped, tag = 'scoped mem for output reshape']
    #allocation1 [shape = 'u8[4096]{0}', space=vmem, size = 0x1000, scoped, tag = 'scoped mem for input reshape']
    %s3 = sshllo.u32 0, 2
    %v4 = vld [vmem:[%s0] sm:%s3]
    %5 = vst [vmem:[#allocation1] sm:%s3] %v4
    %v6 = vld [vmem:[#allocation1] sm:$0x1]
    %vm7 = vcmask 654336
    %8 = vst.msk [vmem:[#allocation0] sm:$0x1] %vm7, %v6
    %s9 = scalar_lea.vmem [#allocation1], 1
    %v10 = vld [vmem:[%s9] sm:$0x1]
    %s11 = scalar_lea.vmem [#allocation1], 1
    %v12 = vld [vmem:[%s11] sm:$0x1]
    %vm13 = vcmask 392192
    %v14 = vsel %vm13, %v12, %v10
    %15 = vrot.lane.b32.xlu0 %v14, 80
    %v16 = vpop.permute.xlu0 %15
    %vm17 = vcmask 261120
    %s18 = scalar_lea.vmem [#allocation0], 8
    %19 = vst.msk [vmem:[%s18] sm:$0x1] %vm17, %v16
    %vm20 = vcmask 1048192
    %21 = vst.msk [vmem:[#allocation0] sm:$0x1] %vm20, %v16
    %s23 = sshllo.u32 0, 1
    %v25 = vld [vmem:[#allocation0] sm:%s23]
    %s26 = sshllo.u32 0, 1
    %27 = vst [vmem:[%s1] sm:%s26] %v25
    %s28 = scalar_lea.vmem [#allocation0], 8
    %v29 = vld [vmem:[%s28] sm:%s23]
    %s30 = sshllo.u32 0, 1
    %s31 = scalar_lea.vmem %s1, 1
    %32 = vst [vmem:[%s31] sm:%s30] %v29

// kernel: tile.9
$region0: #{tile.9}
  %s0 = inlined_call_operand.vmem [shape: f32[6,14], index: 0, kind: input, shape index: {}]
  %s1 = inlined_call_operand.vmem [shape: f32[84], index: 1, kind: output, shape index: {}]
  $region1: #{tile.9} parent=0
    #allocation0 [shape = 'u8[4096]{0}', space=vmem, size = 0x1000, scoped, tag = 'scoped mem for output reshape']
    %v2 = vld [vmem:[%s0] sm:$0x1]
    %vm3 = vcmask 113664
    %4 = vst.msk [vmem:[#allocation0] sm:$0x1] %vm3, %v2
    %s5 = scalar_lea.vmem %s0, 5
    %v6 = vld [vmem:[%s5] sm:$0x1]
    %7 = vrot.lane.b32.xlu0 %v6, 70
    %v8 = vpop.permute.xlu0 %7
    %vm9 = vcmask 687664
    %10 = vst.msk [vmem:[#allocation0] sm:$0x1] %vm9, %v8
    %s11 = scalar_lea.vmem %s0, 4
    %v12 = vld [vmem:[%s11] sm:$0x1]
    %13 = vrot.lane.b32.xlu0 %v12, 56
    %v14 = vpop.permute.xlu0 %13
    %vm15 = vcmask 572864
    %16 = vst.msk [vmem:[#allocation0] sm:$0x1] %vm15, %v14
    %s17 = scalar_lea.vmem %s0, 3
    %v18 = vld [vmem:[%s17] sm:$0x1]
    %19 = vrot.lane.b32.xlu0 %v18, 42
    %v20 = vpop.permute.xlu0 %19
    %vm21 = vcmask 458064
    %22 = vst.msk [vmem:[#allocation0] sm:$0x1] %vm21, %v20
    %s23 = scalar_lea.vmem %s0, 2
    %v24 = vld [vmem:[%s23] sm:$0x1]
    %25 = vrot.lane.b32.xlu0 %v24, 28
    %v26 = vpop.permute.xlu0 %25
    %vm27 = vcmask 343264
    %28 = vst.msk [vmem:[#allocation0] sm:$0x1] %vm27, %v26
    %s29 = scalar_lea.vmem %s0, 1
    %v30 = vld [vmem:[%s29] sm:$0x1]
    %31 = vrot.lane.b32.xlu0 %v30, 14
    %v32 = vpop.permute.xlu0 %31
    %vm33 = vcmask 228464
    %34 = vst.msk [vmem:[#allocation0] sm:$0x1] %vm33, %v32
    %s36 = sshllo.u32 0, 1
    %v38 = vld [vmem:[#allocation0] sm:%s36]
    %s39 = sshllo.u32 0, 1
    %40 = vst [vmem:[%s1] sm:%s39] %v38

// kernel: tile.10
$region0: #{tile.10}
  #allocation0 [shape = 's32[1]{0}', space=sflag, size = 0x4, scoped, tag = 'scoped memory for tile.10']
  %s0 = inlined_call_operand.vmem [shape: f32[84], index: 0, kind: input, shape index: {}]
  %s1 = inlined_call_operand.vmem [shape: f32[2,84], index: 1, kind: output, shape index: {}]
  // Predicated region
  $region2: #{tile.10} parent=0 // pred_check
    _
  $region3: #{tile.10} parent=0 // pred_check_branch
    %3 = sbr.rel (0) target = $region5
  $region4: #{tile.10} parent=0 // pred_region
    _
  $region5: #{tile.10} parent=0 // pred_fallthru
    _
  %v4 = vld [vmem:[%s0] ss:$0 sm:$0xff]
  %5 = vst [vmem:[%s1] sm:$0x3] %v4

// kernel: tile.11
$region0: #{tile.11}
  %s0 = inlined_call_operand.vmem [shape: f32[2,84], index: 0, kind: input, shape index: {}]
  %s1 = inlined_call_operand.vmem [shape: f32[1,168], index: 1, kind: output, shape index: {}]
  $region1: #{tile.11} parent=0
    #allocation0 [shape = 'u8[8192]{0}', space=vmem, size = 0x2000, scoped, tag = 'scoped mem for output reshape']
    #allocation1 [shape = 'u8[4096]{0}', space=vmem, size = 0x1000, scoped, tag = 'scoped mem for input reshape']
    %s3 = sshllo.u32 0, 2
    %v4 = vld [vmem:[%s0] sm:%s3]
    %5 = vst [vmem:[#allocation1] sm:%s3] %v4
    %v6 = vld [vmem:[#allocation1] sm:$0x1]
    %vm7 = vcmask 687104
    %8 = vst.msk [vmem:[#allocation0] sm:$0x1] %vm7, %v6
    %s9 = scalar_lea.vmem [#allocation1], 1
    %v10 = vld [vmem:[%s9] sm:$0x1]
    %s11 = scalar_lea.vmem [#allocation1], 1
    %v12 = vld [vmem:[%s11] sm:$0x1]
    %vm13 = vcmask 359424
    %v14 = vsel %vm13, %v12, %v10
    %15 = vrot.lane.b32.xlu0 %v14, 84
    %v16 = vpop.permute.xlu0 %15
    %vm17 = vcmask 326656
    %s18 = scalar_lea.vmem [#allocation0], 8
    %19 = vst.msk [vmem:[%s18] sm:$0x1] %vm17, %v16
    %vm20 = vcmask 1048224
    %21 = vst.msk [vmem:[#allocation0] sm:$0x1] %vm20, %v16
    %s23 = sshllo.u32 0, 1
    %v25 = vld [vmem:[#allocation0] sm:%s23]
    %s26 = sshllo.u32 0, 1
    %27 = vst [vmem:[%s1] sm:%s26] %v25
    %s28 = scalar_lea.vmem [#allocation0], 8
    %v29 = vld [vmem:[%s28] sm:%s23]
    %s30 = sshllo.u32 0, 1
    %s31 = scalar_lea.vmem %s1, 1
    %32 = vst [vmem:[%s31] sm:%s30] %v29

// kernel: lenet_forward.1
$region0: #{lenet_forward.1}
  #allocation0 [shape = 'u32[]', space=smem, size = 0x4, offset = 0x4, fixed_abs, tag = 'smem constant byte address 0x4 - core index']
  #allocation1 [shape = 'u32[144,128]{1,0:T(1,128)}', space=vmem, size = 0x12000, scoped, tag = 'internal scratch']
  %s0 = inlined_call_operand.vmem [shape: f32[32,8,32], index: 0, kind: input, shape index: {}]
  %s1 = inlined_call_operand.vmem [shape: bf16[160,168], index: 1, kind: input, shape index: {}]
  %s2 = inlined_call_operand.vmem [shape: f32[1,168], index: 2, kind: input, shape index: {}]
  %s3 = inlined_call_operand.vmem [shape: bf16[420,160], index: 3, kind: input, shape index: {}]
  %s4 = inlined_call_operand.vmem [shape: f32[1,160], index: 4, kind: input, shape index: {}]
  %s5 = inlined_call_operand.vmem [shape: bf16[400,128], index: 5, kind: input, shape index: {}]
  %s6 = inlined_call_operand.vmem [shape: f32[1,128], index: 6, kind: input, shape index: {}]
  %s7 = inlined_call_operand.vmem [shape: bf16[128,128], index: 7, kind: input, shape index: {}]
  %s8 = inlined_call_operand.vmem [shape: f32[1,128], index: 8, kind: input, shape index: {}]
  %s9 = inlined_call_operand.vmem [shape: bf16[128,10], index: 9, kind: input, shape index: {}]
  %s10 = inlined_call_operand.vmem [shape: f32[1,10], index: 10, kind: input, shape index: {}]
  %s11 = inlined_call_operand.vmem [shape: f32[8,10], index: 11, kind: output, shape index: {}]
  %s12 = sld [smem:[#allocation0]]
  $region54: #{lenet_forward.1} parent=0
    _
  %s14 = ssub.s32 1, %s12
  %s15 = scalar_select 0, %s14, %s12
  // Predicated region
  $region2: #{lenet_forward.1} parent=0 // pred_check
    _
  $region3: #{lenet_forward.1} parent=0 // pred_check_branch
    %17 = sbr.rel (0) target = $region5
  $region4: #{lenet_forward.1} parent=0 // pred_region
    _
  $region5: #{lenet_forward.1} parent=0 // pred_fallthru
    _
  // Predicated region
  $region6: #{lenet_forward.1} parent=0 // pred_check
    _
  $region7: #{lenet_forward.1} parent=0 // pred_check_branch
    %19 = sbr.rel (0) target = $region9
  $region8: #{lenet_forward.1} parent=0 // pred_region
    _
  $region9: #{lenet_forward.1} parent=0 // pred_fallthru
    _
  // Predicated region
  $region10: #{lenet_forward.1} parent=0 // pred_check
    _
  $region11: #{lenet_forward.1} parent=0 // pred_check_branch
    %21 = sbr.rel (0) target = $region13
  $region12: #{lenet_forward.1} parent=0 // pred_region
    _
  $region13: #{lenet_forward.1} parent=0 // pred_fallthru
    _
  // Predicated region
  $region14: #{lenet_forward.1} parent=0 // pred_check
    _
  $region15: #{lenet_forward.1} parent=0 // pred_check_branch
    %23 = sbr.rel (0) target = $region17
  $region16: #{lenet_forward.1} parent=0 // pred_region
    _
  $region17: #{lenet_forward.1} parent=0 // pred_fallthru
    _
  // Predicated region
  $region18: #{lenet_forward.1} parent=0 // pred_check
    _
  $region19: #{lenet_forward.1} parent=0 // pred_check_branch
    %25 = sbr.rel (0) target = $region21
  $region20: #{lenet_forward.1} parent=0 // pred_region
    _
  $region21: #{lenet_forward.1} parent=0 // pred_fallthru
    _
  // Predicated region
  $region22: #{lenet_forward.1} parent=0 // pred_check
    _
  $region23: #{lenet_forward.1} parent=0 // pred_check_branch
    %27 = sbr.rel (0) target = $region25
  $region24: #{lenet_forward.1} parent=0 // pred_region
    _
  $region25: #{lenet_forward.1} parent=0 // pred_fallthru
    _
  // Predicated region
  $region26: #{lenet_forward.1} parent=0 // pred_check
    _
  $region27: #{lenet_forward.1} parent=0 // pred_check_branch
    %29 = sbr.rel (0) target = $region29
  $region28: #{lenet_forward.1} parent=0 // pred_region
    _
  $region29: #{lenet_forward.1} parent=0 // pred_fallthru
    _
  // Predicated region
  $region30: #{lenet_forward.1} parent=0 // pred_check
    _
  $region31: #{lenet_forward.1} parent=0 // pred_check_branch
    %31 = sbr.rel (0) target = $region33
  $region32: #{lenet_forward.1} parent=0 // pred_region
    _
  $region33: #{lenet_forward.1} parent=0 // pred_fallthru
    _
  // Predicated region
  $region34: #{lenet_forward.1} parent=0 // pred_check
    _
  $region35: #{lenet_forward.1} parent=0 // pred_check_branch
    %33 = sbr.rel (0) target = $region37
  $region36: #{lenet_forward.1} parent=0 // pred_region
    _
  $region37: #{lenet_forward.1} parent=0 // pred_fallthru
    _
  // Predicated region
  $region38: #{lenet_forward.1} parent=0 // pred_check
    _
  $region39: #{lenet_forward.1} parent=0 // pred_check_branch
    %35 = sbr.rel (0) target = $region41
  $region40: #{lenet_forward.1} parent=0 // pred_region
    _
  $region41: #{lenet_forward.1} parent=0 // pred_fallthru
    _
  // Predicated region
  $region42: #{lenet_forward.1} parent=0 // pred_check
    _
  $region43: #{lenet_forward.1} parent=0 // pred_check_branch
    %37 = sbr.rel (0) target = $region45
  $region44: #{lenet_forward.1} parent=0 // pred_region
    _
  $region45: #{lenet_forward.1} parent=0 // pred_fallthru
    _
  %v39 = vld [vmem:[%s0] sm:$0xff]
  %v40 = vld [vmem:[%s0 + $0x8] sm:$0xff]
  %v41 = vld [vmem:[%s0 + $0x10] sm:$0xff]
  %v42 = vld [vmem:[%s0 + $0x18] sm:$0xff]
  %v43 = vld [vmem:[%s0 + $0x20] sm:$0xff]
  %v44 = vld [vmem:[%s0 + $0x28] sm:$0xff]
  %v45 = vld [vmem:[%s0 + $0x30] sm:$0xff]
  %v46 = vld [vmem:[%s0 + $0x38] sm:$0xff]
  %v47 = vld [vmem:[%s0 + $0x40] sm:$0xff]
  %v48 = vld [vmem:[%s0 + $0x48] sm:$0xff]
  %v49 = vld [vmem:[%s0 + $0x50] sm:$0xff]
  %v50 = vld [vmem:[%s0 + $0x58] sm:$0xff]
  %v51 = vld [vmem:[%s0 + $0x60] sm:$0xff]
  %v52 = vld [vmem:[%s0 + $0x68] sm:$0xff]
  %v53 = vld [vmem:[%s0 + $0x70] sm:$0xff]
  %v54 = vld [vmem:[%s0 + $0x78] sm:$0xff]
  %v55 = vld [vmem:[%s0 + $0x80] sm:$0xff]
  %v56 = vld [vmem:[%s0 + $0x88] sm:$0xff]
  %v57 = vld [vmem:[%s0 + $0x90] sm:$0xff]
  %v58 = vld [vmem:[%s0 + $0x98] sm:$0xff]
  %v59 = vld [vmem:[%s0 + $0xa0] sm:$0xff]
  %v60 = vld [vmem:[%s0 + $0xa8] sm:$0xff]
  %v61 = vld [vmem:[%s0 + $0xb0] sm:$0xff]
  %v62 = vld [vmem:[%s0 + $0xb8] sm:$0xff]
  %v63 = vld [vmem:[%s0 + $0xc0] sm:$0xff]
  %v64 = vld [vmem:[%s0 + $0xc8] sm:$0xff]
  %v65 = vld [vmem:[%s0 + $0xd0] sm:$0xff]
  %v66 = vld [vmem:[%s0 + $0xd8] sm:$0xff]
  %v67 = vld [vmem:[%s0 + $0xe0] sm:$0xff]
  %v68 = vld [vmem:[%s0 + $0xe8] sm:$0xff]
  %v69 = vld [vmem:[%s0 + $0xf0] sm:$0xff]
  %v70 = vld [vmem:[%s0 + $0xf8] sm:$0xff]
  %99 = vrot.lane.b32.xlu0 %v40, 32
  %v100 = vpop.permute.xlu0 %99
  %101 = vrot.lane.b32.xlu0 %v41, 32
  %v102 = vpop.permute.xlu0 %101
  %103 = vrot.lane.b32.xlu0 %v42, 32
  %v104 = vpop.permute.xlu0 %103
  %105 = vrot.lane.b32.xlu0 %v43, 32
  %v106 = vpop.permute.xlu0 %105
  %107 = vrot.lane.b32.xlu0 %v44, 32
  %v108 = vpop.permute.xlu0 %107
  %109 = vrot.lane.b32.xlu0 %v45, 32
  %v110 = vpop.permute.xlu0 %109
  %111 = vrot.lane.b32.xlu0 %v46, 32
  %v112 = vpop.permute.xlu0 %111
  %113 = vrot.lane.b32.xlu0 %v47, 32
  %v114 = vpop.permute.xlu0 %113
  %115 = vrot.lane.b32.xlu0 %v48, 32
  %v116 = vpop.permute.xlu0 %115
  %117 = vrot.lane.b32.xlu0 %v49, 32
  %v118 = vpop.permute.xlu0 %117
  %119 = vrot.lane.b32.xlu0 %v50, 32
  %v120 = vpop.permute.xlu0 %119
  %121 = vrot.lane.b32.xlu0 %v51, 32
  %v122 = vpop.permute.xlu0 %121
  %123 = vrot.lane.b32.xlu0 %v52, 32
  %v124 = vpop.permute.xlu0 %123
  %125 = vrot.lane.b32.xlu0 %v53, 32
  %v126 = vpop.permute.xlu0 %125
  %127 = vrot.lane.b32.xlu0 %v54, 32
  %v128 = vpop.permute.xlu0 %127
  %129 = vrot.lane.b32.xlu0 %v55, 32
  %v130 = vpop.permute.xlu0 %129
  %131 = vrot.lane.b32.xlu0 %v56, 32
  %v132 = vpop.permute.xlu0 %131
  %133 = vrot.lane.b32.xlu0 %v57, 32
  %v134 = vpop.permute.xlu0 %133
  %135 = vrot.lane.b32.xlu0 %v58, 32
  %v136 = vpop.permute.xlu0 %135
  %137 = vrot.lane.b32.xlu0 %v59, 32
  %v138 = vpop.permute.xlu0 %137
  %139 = vrot.lane.b32.xlu0 %v60, 32
  %v140 = vpop.permute.xlu0 %139
  %141 = vrot.lane.b32.xlu0 %v61, 32
  %v142 = vpop.permute.xlu0 %141
  %143 = vrot.lane.b32.xlu0 %v62, 32
  %v144 = vpop.permute.xlu0 %143
  %145 = vrot.lane.b32.xlu0 %v63, 32
  %v146 = vpop.permute.xlu0 %145
  %147 = vrot.lane.b32.xlu0 %v64, 32
  %v148 = vpop.permute.xlu0 %147
  %149 = vrot.lane.b32.xlu0 %v65, 32
  %v150 = vpop.permute.xlu0 %149
  %151 = vrot.lane.b32.xlu0 %v66, 32
  %v152 = vpop.permute.xlu0 %151
  %153 = vrot.lane.b32.xlu0 %v67, 32
  %v154 = vpop.permute.xlu0 %153
  %184 = vrot.lane.b32.xlu0 %v41, 64
  %v185 = vpop.permute.xlu0 %184
  %186 = vrot.lane.b32.xlu0 %v42, 64
  %v187 = vpop.permute.xlu0 %186
  %188 = vrot.lane.b32.xlu0 %v43, 64
  %v189 = vpop.permute.xlu0 %188
  %190 = vrot.lane.b32.xlu0 %v44, 64
  %v191 = vpop.permute.xlu0 %190
  %192 = vrot.lane.b32.xlu0 %v45, 64
  %v193 = vpop.permute.xlu0 %192
  %194 = vrot.lane.b32.xlu0 %v46, 64
  %v195 = vpop.permute.xlu0 %194
  %196 = vrot.lane.b32.xlu0 %v47, 64
  %v197 = vpop.permute.xlu0 %196
  %198 = vrot.lane.b32.xlu0 %v48, 64
  %v199 = vpop.permute.xlu0 %198
  %200 = vrot.lane.b32.xlu0 %v49, 64
  %v201 = vpop.permute.xlu0 %200
  %202 = vrot.lane.b32.xlu0 %v50, 64
  %v203 = vpop.permute.xlu0 %202
  %204 = vrot.lane.b32.xlu0 %v51, 64
  %v205 = vpop.permute.xlu0 %204
  %206 = vrot.lane.b32.xlu0 %v52, 64
  %v207 = vpop.permute.xlu0 %206
  %208 = vrot.lane.b32.xlu0 %v53, 64
  %v209 = vpop.permute.xlu0 %208
  %210 = vrot.lane.b32.xlu0 %v54, 64
  %v211 = vpop.permute.xlu0 %210
  %212 = vrot.lane.b32.xlu0 %v55, 64
  %v213 = vpop.permute.xlu0 %212
  %214 = vrot.lane.b32.xlu0 %v56, 64
  %v215 = vpop.permute.xlu0 %214
  %216 = vrot.lane.b32.xlu0 %v57, 64
  %v217 = vpop.permute.xlu0 %216
  %218 = vrot.lane.b32.xlu0 %v58, 64
  %v219 = vpop.permute.xlu0 %218
  %220 = vrot.lane.b32.xlu0 %v59, 64
  %v221 = vpop.permute.xlu0 %220
  %222 = vrot.lane.b32.xlu0 %v60, 64
  %v223 = vpop.permute.xlu0 %222
  %224 = vrot.lane.b32.xlu0 %v61, 64
  %v225 = vpop.permute.xlu0 %224
  %226 = vrot.lane.b32.xlu0 %v62, 64
  %v227 = vpop.permute.xlu0 %226
  %228 = vrot.lane.b32.xlu0 %v63, 64
  %v229 = vpop.permute.xlu0 %228
  %230 = vrot.lane.b32.xlu0 %v64, 64
  %v231 = vpop.permute.xlu0 %230
  %232 = vrot.lane.b32.xlu0 %v65, 64
  %v233 = vpop.permute.xlu0 %232
  %234 = vrot.lane.b32.xlu0 %v66, 64
  %v235 = vpop.permute.xlu0 %234
  %236 = vrot.lane.b32.xlu0 %v67, 64
  %v237 = vpop.permute.xlu0 %236
  %238 = vrot.lane.b32.xlu0 %v68, 64
  %v239 = vpop.permute.xlu0 %238
  %269 = vrot.lane.b32.xlu0 %v42, 96
  %v270 = vpop.permute.xlu0 %269
  %271 = vrot.lane.b32.xlu0 %v43, 96
  %v272 = vpop.permute.xlu0 %271
  %273 = vrot.lane.b32.xlu0 %v44, 96
  %v274 = vpop.permute.xlu0 %273
  %275 = vrot.lane.b32.xlu0 %v45, 96
  %v276 = vpop.permute.xlu0 %275
  %277 = vrot.lane.b32.xlu0 %v46, 96
  %v278 = vpop.permute.xlu0 %277
  %279 = vrot.lane.b32.xlu0 %v47, 96
  %v280 = vpop.permute.xlu0 %279
  %281 = vrot.lane.b32.xlu0 %v48, 96
  %v282 = vpop.permute.xlu0 %281
  %283 = vrot.lane.b32.xlu0 %v49, 96
  %v284 = vpop.permute.xlu0 %283
  %285 = vrot.lane.b32.xlu0 %v50, 96
  %v286 = vpop.permute.xlu0 %285
  %287 = vrot.lane.b32.xlu0 %v51, 96
  %v288 = vpop.permute.xlu0 %287
  %289 = vrot.lane.b32.xlu0 %v52, 96
  %v290 = vpop.permute.xlu0 %289
  %291 = vrot.lane.b32.xlu0 %v53, 96
  %v292 = vpop.permute.xlu0 %291
  %293 = vrot.lane.b32.xlu0 %v54, 96
  %v294 = vpop.permute.xlu0 %293
  %295 = vrot.lane.b32.xlu0 %v55, 96
  %v296 = vpop.permute.xlu0 %295
  %297 = vrot.lane.b32.xlu0 %v56, 96
  %v298 = vpop.permute.xlu0 %297
  %299 = vrot.lane.b32.xlu0 %v57, 96
  %v300 = vpop.permute.xlu0 %299
  %301 = vrot.lane.b32.xlu0 %v58, 96
  %v302 = vpop.permute.xlu0 %301
  %303 = vrot.lane.b32.xlu0 %v59, 96
  %v304 = vpop.permute.xlu0 %303
  %305 = vrot.lane.b32.xlu0 %v60, 96
  %v306 = vpop.permute.xlu0 %305
  %307 = vrot.lane.b32.xlu0 %v61, 96
  %v308 = vpop.permute.xlu0 %307
  %309 = vrot.lane.b32.xlu0 %v62, 96
  %v310 = vpop.permute.xlu0 %309
  %311 = vrot.lane.b32.xlu0 %v63, 96
  %v312 = vpop.permute.xlu0 %311
  %313 = vrot.lane.b32.xlu0 %v64, 96
  %v314 = vpop.permute.xlu0 %313
  %315 = vrot.lane.b32.xlu0 %v65, 96
  %v316 = vpop.permute.xlu0 %315
  %317 = vrot.lane.b32.xlu0 %v66, 96
  %v318 = vpop.permute.xlu0 %317
  %319 = vrot.lane.b32.xlu0 %v67, 96
  %v320 = vpop.permute.xlu0 %319
  %321 = vrot.lane.b32.xlu0 %v68, 96
  %v322 = vpop.permute.xlu0 %321
  %323 = vrot.lane.b32.xlu0 %v69, 96
  %v324 = vpop.permute.xlu0 %323
  %vm353 = vcmask 261120
  %v354 = vsel %vm353, %v39, %v100
  %v355 = vsel %vm353, %v40, %v102
  %v356 = vsel %vm353, %v41, %v104
  %v357 = vsel %vm353, %v42, %v106
  %v358 = vsel %vm353, %v43, %v108
  %v359 = vsel %vm353, %v44, %v110
  %v360 = vsel %vm353, %v45, %v112
  %v361 = vsel %vm353, %v46, %v114
  %v362 = vsel %vm353, %v47, %v116
  %v363 = vsel %vm353, %v48, %v118
  %v364 = vsel %vm353, %v49, %v120
  %v365 = vsel %vm353, %v50, %v122
  %v366 = vsel %vm353, %v51, %v124
  %v367 = vsel %vm353, %v52, %v126
  %v368 = vsel %vm353, %v53, %v128
  %v369 = vsel %vm353, %v54, %v130
  %v370 = vsel %vm353, %v55, %v132
  %v371 = vsel %vm353, %v56, %v134
  %v372 = vsel %vm353, %v57, %v136
  %v373 = vsel %vm353, %v58, %v138
  %v374 = vsel %vm353, %v59, %v140
  %v375 = vsel %vm353, %v60, %v142
  %v376 = vsel %vm353, %v61, %v144
  %v377 = vsel %vm353, %v62, %v146
  %v378 = vsel %vm353, %v63, %v148
  %v379 = vsel %vm353, %v64, %v150
  %v380 = vsel %vm353, %v65, %v152
  %v381 = vsel %vm353, %v66, %v154
  %vm382 = vcmask 523264
  %v383 = vsel %vm382, %v354, %v185
  %v384 = vsel %vm382, %v355, %v187
  %v385 = vsel %vm382, %v356, %v189
  %v386 = vsel %vm382, %v357, %v191
  %v387 = vsel %vm382, %v358, %v193
  %v388 = vsel %vm382, %v359, %v195
  %v389 = vsel %vm382, %v360, %v197
  %v390 = vsel %vm382, %v361, %v199
  %v391 = vsel %vm382, %v362, %v201
  %v392 = vsel %vm382, %v363, %v203
  %v393 = vsel %vm382, %v364, %v205
  %v394 = vsel %vm382, %v365, %v207
  %v395 = vsel %vm382, %v366, %v209
  %v396 = vsel %vm382, %v367, %v211
  %v397 = vsel %vm382, %v368, %v213
  %v398 = vsel %vm382, %v369, %v215
  %v399 = vsel %vm382, %v370, %v217
  %v400 = vsel %vm382, %v371, %v219
  %v401 = vsel %vm382, %v372, %v221
  %v402 = vsel %vm382, %v373, %v223
  %v403 = vsel %vm382, %v374, %v225
  %v404 = vsel %vm382, %v375, %v227
  %v405 = vsel %vm382, %v376, %v229
  %v406 = vsel %vm382, %v377, %v231
  %v407 = vsel %vm382, %v378, %v233
  %v408 = vsel %vm382, %v379, %v235
  %v409 = vsel %vm382, %v380, %v237
  %v410 = vsel %vm382, %v381, %v239
  %vm411 = vcmask 785408
  %v412 = vsel %vm411, %v383, %v270
  %v413 = vsel %vm411, %v384, %v272
  %v414 = vsel %vm411, %v385, %v274
  %v415 = vsel %vm411, %v386, %v276
  %v416 = vsel %vm411, %v387, %v278
  %v417 = vsel %vm411, %v388, %v280
  %v418 = vsel %vm411, %v389, %v282
  %v419 = vsel %vm411, %v390, %v284
  %v420 = vsel %vm411, %v391, %v286
  %v421 = vsel %vm411, %v392, %v288
  %v422 = vsel %vm411, %v393, %v290
  %v423 = vsel %vm411, %v394, %v292
  %v424 = vsel %vm411, %v395, %v294
  %v425 = vsel %vm411, %v396, %v296
  %v426 = vsel %vm411, %v397, %v298
  %v427 = vsel %vm411, %v398, %v300
  %v428 = vsel %vm411, %v399, %v302
  %v429 = vsel %vm411, %v400, %v304
  %v430 = vsel %vm411, %v401, %v306
  %v431 = vsel %vm411, %v402, %v308
  %v432 = vsel %vm411, %v403, %v310
  %v433 = vsel %vm411, %v404, %v312
  %v434 = vsel %vm411, %v405, %v314
  %v435 = vsel %vm411, %v406, %v316
  %v436 = vsel %vm411, %v407, %v318
  %v437 = vsel %vm411, %v408, %v320
  %v438 = vsel %vm411, %v409, %v322
  %v439 = vsel %vm411, %v410, %v324
  %v440 = vpack.c.bf16 %v413, %v412
  %v441 = vpack.c.bf16 %v44, %v43
  %v442 = vpack.c.bf16 %v415, %v414
  %v443 = vpack.c.bf16 %v46, %v45
  %v444 = vpack.c.bf16 %v417, %v416
  %v445 = vpack.c.bf16 %v48, %v47
  %v446 = vpack.c.bf16 %v419, %v418
  %v447 = vpack.c.bf16 %v50, %v49
  %v448 = vpack.c.bf16 %v421, %v420
  %v449 = vpack.c.bf16 %v52, %v51
  %v450 = vpack.c.bf16 %v423, %v422
  %v451 = vpack.c.bf16 %v54, %v53
  %v452 = vpack.c.bf16 %v425, %v424
  %v453 = vpack.c.bf16 %v56, %v55
  %v454 = vpack.c.bf16 %v427, %v426
  %v455 = vpack.c.bf16 %v58, %v57
  %v456 = vpack.c.bf16 %v429, %v428
  %v457 = vpack.c.bf16 %v60, %v59
  %v458 = vpack.c.bf16 %v431, %v430
  %v459 = vpack.c.bf16 %v62, %v61
  %v460 = vpack.c.bf16 %v433, %v432
  %v461 = vpack.c.bf16 %v64, %v63
  %v462 = vpack.c.bf16 %v435, %v434
  %v463 = vpack.c.bf16 %v66, %v65
  %v464 = vpack.c.bf16 %v437, %v436
  %v465 = vpack.c.bf16 %v68, %v67
  %v466 = vpack.c.bf16 %v439, %v438
  %v467 = vpack.c.bf16 %v70, %v69
  %v468 = vld [vmem:[%s1] sm:$0xff]
  %v469 = vld [vmem:[%s1 + $0x8] sm:$0xff]
  %v470 = vld [vmem:[%s1 + $0x10] sm:$0xff]
  %v471 = vld [vmem:[%s1 + $0x18] sm:$0xff]
  %v472 = vld [vmem:[%s1 + $0x20] sm:$0xff]
  %v473 = vld [vmem:[%s1 + $0x28] sm:$0xff]
  %v474 = vld [vmem:[%s1 + $0x30] sm:$0xff]
  %v475 = vld [vmem:[%s1 + $0x38] sm:$0xff]
  %v476 = vld [vmem:[%s1 + $0x40] sm:$0xff]
  %v477 = vld [vmem:[%s1 + $0x48] sm:$0xff]
  %v478 = vld [vmem:[%s1 + $0x50] sm:$0xff]
  %v479 = vld [vmem:[%s1 + $0x58] sm:$0xff]
  %v480 = vld [vmem:[%s1 + $0x60] sm:$0xff]
  %v481 = vld [vmem:[%s1 + $0x68] sm:$0xff]
  %v482 = vld [vmem:[%s1 + $0x70] sm:$0xff]
  %v483 = vld [vmem:[%s1 + $0x78] sm:$0xff]
  %v484 = vld [vmem:[%s1 + $0x80] sm:$0xff]
  %v485 = vld [vmem:[%s1 + $0x88] sm:$0xff]
  %v486 = vld [vmem:[%s1 + $0x90] sm:$0xff]
  %v487 = vld [vmem:[%s1 + $0x98] sm:$0xff]
  %v488 = vld [vmem:[%s2] sm:$0x3]
  %v490 = vlaneseq
  %v491 = vshrl.u32 %v490, 7
  %v492 = vsub.s32 0, %v491
  %v493 = vrot.slane %v488, %v492
  %v494 = vlaneseq
  %v495 = vshrl.u32 %v494, 7
  %v496 = vsub.s32 1, %v495
  %v497 = vrot.slane %v488, %v496
  %v520 = vunpack.c.l.b16 %v468
  %v521 = vunpack.c.h.b16 %v468
  %v522 = vunpack.c.l.b16 %v469
  %v523 = vunpack.c.h.b16 %v469
  %v524 = vunpack.c.l.b16 %v470
  %v525 = vunpack.c.h.b16 %v470
  %v526 = vunpack.c.l.b16 %v471
  %v527 = vunpack.c.h.b16 %v471
  %v528 = vunpack.c.l.b16 %v472
  %v529 = vunpack.c.h.b16 %v472
  %v530 = vunpack.c.l.b16 %v473
  %v531 = vunpack.c.h.b16 %v473
  %v532 = vunpack.c.l.b16 %v474
  %v533 = vunpack.c.h.b16 %v474
  %v534 = vunpack.c.l.b16 %v475
  %v535 = vunpack.c.h.b16 %v475
  %v536 = vunpack.c.l.b16 %v476
  %v537 = vunpack.c.h.b16 %v476
  %v538 = vunpack.c.l.b16 %v477
  %v539 = vunpack.c.h.b16 %v477
  %v540 = vunpack.c.l.b16 %v478
  %v541 = vunpack.c.h.b16 %v478
  %v542 = vunpack.c.l.b16 %v479
  %v543 = vunpack.c.h.b16 %v479
  %v544 = vunpack.c.l.b16 %v480
  %v545 = vunpack.c.h.b16 %v480
  %v546 = vunpack.c.l.b16 %v481
  %v547 = vunpack.c.h.b16 %v481
  %v548 = vunpack.c.l.b16 %v482
  %v549 = vunpack.c.h.b16 %v482
  %v550 = vunpack.c.l.b16 %v483
  %v551 = vunpack.c.h.b16 %v483
  %v552 = vunpack.c.l.b16 %v484
  %v553 = vunpack.c.h.b16 %v484
  %v554 = vunpack.c.l.b16 %v485
  %v555 = vunpack.c.h.b16 %v485
  %v556 = vunpack.c.l.b16 %v486
  %v557 = vunpack.c.h.b16 %v486
  %v558 = vunpack.c.l.b16 %v487
  %v559 = vunpack.c.h.b16 %v487
  %v560 = vpack.c.b16 %v522, %v520
  %v561 = vpack.c.b16 %v523, %v521
  %v562 = vpack.c.b16 %v526, %v524
  %v563 = vpack.c.b16 %v527, %v525
  %v564 = vpack.c.b16 %v530, %v528
  %v565 = vpack.c.b16 %v531, %v529
  %v566 = vpack.c.b16 %v534, %v532
  %v567 = vpack.c.b16 %v535, %v533
  %v568 = vpack.c.b16 %v538, %v536
  %v569 = vpack.c.b16 %v539, %v537
  %v570 = vpack.c.b16 %v542, %v540
  %v571 = vpack.c.b16 %v543, %v541
  %v572 = vpack.c.b16 %v546, %v544
  %v573 = vpack.c.b16 %v547, %v545
  %v574 = vpack.c.b16 %v550, %v548
  %v575 = vpack.c.b16 %v551, %v549
  %v576 = vpack.c.b16 %v554, %v552
  %v577 = vpack.c.b16 %v555, %v553
  %v578 = vpack.c.b16 %v558, %v556
  %v579 = vpack.c.b16 %v559, %v557
  %v601 = vsel %vm353, %v441, 0
  %v604 = vsel %vm353, %v443, 0
  %v607 = vsel %vm353, %v445, 0
  %v610 = vsel %vm353, %v447, 0
  %v613 = vsel %vm353, %v449, 0
  %v616 = vsel %vm353, %v451, 0
  %v619 = vsel %vm353, %v453, 0
  %v622 = vsel %vm353, %v455, 0
  %v625 = vsel %vm353, %v457, 0
  %v628 = vsel %vm353, %v459, 0
  %v631 = vsel %vm353, %v461, 0
  %v634 = vsel %vm353, %v463, 0
  %v637 = vsel %vm353, %v465, 0
  %v640 = vsel %vm353, %v467, 0
  %642 = vmatprep.subr.bf16.mxu0 %v561
  %643 = vmatpush1.bf16.msra.mxu0 %v560
  %644 = vmatprep.subr.bf16.mxu0 %v563
  %645 = vmatpush1.bf16.msra.mxu0 %v562
  %646 = vmatprep.subr.bf16.mxu0 %v565
  %647 = vmatpush1.bf16.msra.mxu0 %v564
  %648 = vmatprep.subr.bf16.mxu0 %v567
  %649 = vmatpush1.bf16.msra.mxu0 %v566
  %650 = vmatprep.subr.bf16.mxu0 %v569
  %651 = vmatpush1.bf16.msra.mxu0 %v568
  %652 = vmatprep.subr.bf16.mxu0 %v571
  %653 = vmatpush1.bf16.msra.mxu0 %v570
  %654 = vmatprep.subr.bf16.mxu0 %v573
  %655 = vmatpush1.bf16.msra.mxu0 %v572
  %656 = vmatprep.subr.bf16.mxu0 %v575
  %657 = vmatpush1.bf16.msra.mxu0 %v574
  %658 = vmatprep.subr.bf16.mxu0 %v577
  %659 = vmatpush1.bf16.msra.mxu0 %v576
  %660 = vmatprep.subr.bf16.mxu0 %v579
  %661 = vmatpush1.bf16.msra.mxu0 %v578
  %662 = vmatprep.subr.bf16.mxu0 0
  %663 = vmatpush1.bf16.msra.mxu0 0
  %664 = vmatprep.subr.bf16.mxu0 0
  %665 = vmatpush1.bf16.msra.mxu0 0
  %666 = vmatprep.subr.bf16.mxu0 0
  %667 = vmatpush1.bf16.msra.mxu0 0
  %668 = vmatprep.subr.bf16.mxu0 0
  %669 = vmatpush1.bf16.msra.mxu0 0
  %670 = vmatprep.subr.bf16.mxu0 0
  %671 = vmatpush1.bf16.msra.mxu0 0
  %672 = vmatprep.subr.bf16.mxu0 0
  %673 = vmatpush1.bf16.msra.mxu0 0
  %674 = vmatprep.mubr.bf16.mxu0 %v601
  %675 = vmatmul.mubr.bf16.gmra.mrb[0].mxu0 %v440
  %v676 = vpop.f32.mrb[0].mxu0
  %v677 = vadd.f32 %v493, %v676
  %v678 = vpop.f32.mrb[0].mxu0
  %v679 = vadd.f32 %v497, %v678
  %v680 = vpop.f32.mrb[0].mxu0
  %v681 = vadd.f32 %v493, %v680
  %v682 = vpop.f32.mrb[0].mxu0
  %v683 = vadd.f32 %v497, %v682
  %684 = vmatprep.mubr.bf16.mxu0 %v604
  %685 = vmatmul.mubr.bf16.gmra.mrb[0].mxu0 %v442
  %v686 = vpop.f32.mrb[0].mxu0
  %v687 = vadd.f32 %v493, %v686
  %v688 = vpop.f32.mrb[0].mxu0
  %v689 = vadd.f32 %v497, %v688
  %v690 = vpop.f32.mrb[0].mxu0
  %v691 = vadd.f32 %v493, %v690
  %v692 = vpop.f32.mrb[0].mxu0
  %v693 = vadd.f32 %v497, %v692
  %694 = vmatprep.mubr.bf16.mxu0 %v607
  %695 = vmatmul.mubr.bf16.gmra.mrb[0].mxu0 %v444
  %v696 = vpop.f32.mrb[0].mxu0
  %v697 = vadd.f32 %v493, %v696
  %v698 = vpop.f32.mrb[0].mxu0
  %v699 = vadd.f32 %v497, %v698
  %v700 = vpop.f32.mrb[0].mxu0
  %v701 = vadd.f32 %v493, %v700
  %v702 = vpop.f32.mrb[0].mxu0
  %v703 = vadd.f32 %v497, %v702
  %704 = vmatprep.mubr.bf16.mxu0 %v610
  %705 = vmatmul.mubr.bf16.gmra.mrb[0].mxu0 %v446
  %v706 = vpop.f32.mrb[0].mxu0
  %v707 = vadd.f32 %v493, %v706
  %v708 = vpop.f32.mrb[0].mxu0
  %v709 = vadd.f32 %v497, %v708
  %v710 = vpop.f32.mrb[0].mxu0
  %v711 = vadd.f32 %v493, %v710
  %v712 = vpop.f32.mrb[0].mxu0
  %v713 = vadd.f32 %v497, %v712
  %714 = vmatprep.mubr.bf16.mxu0 %v613
  %715 = vmatmul.mubr.bf16.gmra.mrb[0].mxu0 %v448
  %v716 = vpop.f32.mrb[0].mxu0
  %v717 = vadd.f32 %v493, %v716
  %v718 = vpop.f32.mrb[0].mxu0
  %v719 = vadd.f32 %v497, %v718
  %v720 = vpop.f32.mrb[0].mxu0
  %v721 = vadd.f32 %v493, %v720
  %v722 = vpop.f32.mrb[0].mxu0
  %v723 = vadd.f32 %v497, %v722
  %724 = vmatprep.mubr.bf16.mxu0 %v616
  %725 = vmatmul.mubr.bf16.gmra.mrb[0].mxu0 %v450
  %v726 = vpop.f32.mrb[0].mxu0
  %v727 = vadd.f32 %v493, %v726
  %v728 = vpop.f32.mrb[0].mxu0
  %v729 = vadd.f32 %v497, %v728
  %v730 = vpop.f32.mrb[0].mxu0
  %v731 = vadd.f32 %v493, %v730
  %v732 = vpop.f32.mrb[0].mxu0
  %v733 = vadd.f32 %v497, %v732
  %734 = vmatprep.mubr.bf16.mxu0 %v619
  %735 = vmatmul.mubr.bf16.gmra.mrb[0].mxu0 %v452
  %v736 = vpop.f32.mrb[0].mxu0
  %v737 = vadd.f32 %v493, %v736
  %v738 = vpop.f32.mrb[0].mxu0
  %v739 = vadd.f32 %v497, %v738
  %v740 = vpop.f32.mrb[0].mxu0
  %v741 = vadd.f32 %v493, %v740
  %v742 = vpop.f32.mrb[0].mxu0
  %v743 = vadd.f32 %v497, %v742
  %744 = vmatprep.mubr.bf16.mxu0 %v622
  %745 = vmatmul.mubr.bf16.gmra.mrb[0].mxu0 %v454
  %v746 = vpop.f32.mrb[0].mxu0
  %v747 = vadd.f32 %v493, %v746
  %v748 = vpop.f32.mrb[0].mxu0
  %v749 = vadd.f32 %v497, %v748
  %v750 = vpop.f32.mrb[0].mxu0
  %v751 = vadd.f32 %v493, %v750
  %v752 = vpop.f32.mrb[0].mxu0
  %v753 = vadd.f32 %v497, %v752
  %754 = vmatprep.mubr.bf16.mxu0 %v625
  %755 = vmatmul.mubr.bf16.gmra.mrb[0].mxu0 %v456
  %v756 = vpop.f32.mrb[0].mxu0
  %v757 = vadd.f32 %v493, %v756
  %v758 = vpop.f32.mrb[0].mxu0
  %v759 = vadd.f32 %v497, %v758
  %v760 = vpop.f32.mrb[0].mxu0
  %v761 = vadd.f32 %v493, %v760
  %v762 = vpop.f32.mrb[0].mxu0
  %v763 = vadd.f32 %v497, %v762
  %764 = vmatprep.mubr.bf16.mxu0 %v628
  %765 = vmatmul.mubr.bf16.gmra.mrb[0].mxu0 %v458
  %v766 = vpop.f32.mrb[0].mxu0
  %v767 = vadd.f32 %v493, %v766
  %v768 = vpop.f32.mrb[0].mxu0
  %v769 = vadd.f32 %v497, %v768
  %v770 = vpop.f32.mrb[0].mxu0
  %v771 = vadd.f32 %v493, %v770
  %v772 = vpop.f32.mrb[0].mxu0
  %v773 = vadd.f32 %v497, %v772
  %774 = vmatprep.mubr.bf16.mxu0 %v631
  %775 = vmatmul.mubr.bf16.gmra.mrb[0].mxu0 %v460
  %v776 = vpop.f32.mrb[0].mxu0
  %v777 = vadd.f32 %v493, %v776
  %v778 = vpop.f32.mrb[0].mxu0
  %v779 = vadd.f32 %v497, %v778
  %v780 = vpop.f32.mrb[0].mxu0
  %v781 = vadd.f32 %v493, %v780
  %v782 = vpop.f32.mrb[0].mxu0
  %v783 = vadd.f32 %v497, %v782
  %784 = vmatprep.mubr.bf16.mxu0 %v634
  %785 = vmatmul.mubr.bf16.gmra.mrb[0].mxu0 %v462
  %v786 = vpop.f32.mrb[0].mxu0
  %v787 = vadd.f32 %v493, %v786
  %v788 = vpop.f32.mrb[0].mxu0
  %v789 = vadd.f32 %v497, %v788
  %v790 = vpop.f32.mrb[0].mxu0
  %v791 = vadd.f32 %v493, %v790
  %v792 = vpop.f32.mrb[0].mxu0
  %v793 = vadd.f32 %v497, %v792
  %794 = vmatprep.mubr.bf16.mxu0 %v637
  %795 = vmatmul.mubr.bf16.gmra.mrb[0].mxu0 %v464
  %v796 = vpop.f32.mrb[0].mxu0
  %v797 = vadd.f32 %v493, %v796
  %v798 = vpop.f32.mrb[0].mxu0
  %v799 = vadd.f32 %v497, %v798
  %v800 = vpop.f32.mrb[0].mxu0
  %v801 = vadd.f32 %v493, %v800
  %v802 = vpop.f32.mrb[0].mxu0
  %v803 = vadd.f32 %v497, %v802
  %804 = vmatprep.mubr.bf16.mxu0 %v640
  %805 = vmatmul.mubr.bf16.gmra.mrb[0].mxu0 %v466
  %v806 = vpop.f32.mrb[0].mxu0
  %v807 = vadd.f32 %v493, %v806
  %v808 = vpop.f32.mrb[0].mxu0
  %v809 = vadd.f32 %v497, %v808
  %v810 = vpop.f32.mrb[0].mxu0
  %v811 = vadd.f32 %v493, %v810
  %v812 = vpop.f32.mrb[0].mxu0
  %v813 = vadd.f32 %v497, %v812
  %814 = vdwg.mxu0
  %v815 = vmax.f32 %v677, 0.0
  %v816 = vmax.f32 %v679, 0.0
  %v817 = vmax.f32 %v681, 0.0
  %v818 = vmax.f32 %v683, 0.0
  %v819 = vmax.f32 %v687, 0.0
  %v820 = vmax.f32 %v689, 0.0
  %v821 = vmax.f32 %v691, 0.0
  %v822 = vmax.f32 %v693, 0.0
  %v823 = vmax.f32 %v697, 0.0
  %v824 = vmax.f32 %v699, 0.0
  %v825 = vmax.f32 %v701, 0.0
  %v826 = vmax.f32 %v703, 0.0
  %v827 = vmax.f32 %v707, 0.0
  %v828 = vmax.f32 %v709, 0.0
  %v829 = vmax.f32 %v711, 0.0
  %v830 = vmax.f32 %v713, 0.0
  %v831 = vmax.f32 %v717, 0.0
  %v832 = vmax.f32 %v719, 0.0
  %v833 = vmax.f32 %v721, 0.0
  %v834 = vmax.f32 %v723, 0.0
  %v835 = vmax.f32 %v727, 0.0
  %v836 = vmax.f32 %v729, 0.0
  %v837 = vmax.f32 %v731, 0.0
  %v838 = vmax.f32 %v733, 0.0
  %v839 = vmax.f32 %v737, 0.0
  %v840 = vmax.f32 %v739, 0.0
  %v841 = vmax.f32 %v741, 0.0
  %v842 = vmax.f32 %v743, 0.0
  %v843 = vmax.f32 %v747, 0.0
  %v844 = vmax.f32 %v749, 0.0
  %v845 = vmax.f32 %v751, 0.0
  %v846 = vmax.f32 %v753, 0.0
  %v847 = vmax.f32 %v757, 0.0
  %v848 = vmax.f32 %v759, 0.0
  %v849 = vmax.f32 %v761, 0.0
  %v850 = vmax.f32 %v763, 0.0
  %v851 = vmax.f32 %v767, 0.0
  %v852 = vmax.f32 %v769, 0.0
  %v853 = vmax.f32 %v771, 0.0
  %v854 = vmax.f32 %v773, 0.0
  %v855 = vmax.f32 %v777, 0.0
  %v856 = vmax.f32 %v779, 0.0
  %v857 = vmax.f32 %v781, 0.0
  %v858 = vmax.f32 %v783, 0.0
  %v859 = vmax.f32 %v787, 0.0
  %v860 = vmax.f32 %v789, 0.0
  %v861 = vmax.f32 %v791, 0.0
  %v862 = vmax.f32 %v793, 0.0
  %v863 = vmax.f32 %v797, 0.0
  %v864 = vmax.f32 %v799, 0.0
  %v865 = vmax.f32 %v801, 0.0
  %v866 = vmax.f32 %v803, 0.0
  %v867 = vmax.f32 %v807, 0.0
  %v868 = vmax.f32 %v809, 0.0
  %v869 = vmax.f32 %v811, 0.0
  %v870 = vmax.f32 %v813, 0.0
  %v871 = vmax.f32 %v815, %v817
  %v872 = vmax.f32 %v816, %v818
  %v873 = vmax.f32 %v819, %v821
  %v874 = vmax.f32 %v820, %v822
  %v875 = vmax.f32 %v823, %v825
  %v876 = vmax.f32 %v824, %v826
  %v877 = vmax.f32 %v827, %v829
  %v878 = vmax.f32 %v828, %v830
  %v879 = vmax.f32 %v831, %v833
  %v880 = vmax.f32 %v832, %v834
  %v881 = vmax.f32 %v835, %v837
  %v882 = vmax.f32 %v836, %v838
  %v883 = vmax.f32 %v839, %v841
  %v884 = vmax.f32 %v840, %v842
  %v885 = vmax.f32 %v843, %v845
  %v886 = vmax.f32 %v844, %v846
  %v887 = vmax.f32 %v847, %v849
  %v888 = vmax.f32 %v848, %v850
  %v889 = vmax.f32 %v851, %v853
  %v890 = vmax.f32 %v852, %v854
  %v891 = vmax.f32 %v855, %v857
  %v892 = vmax.f32 %v856, %v858
  %v893 = vmax.f32 %v859, %v861
  %v894 = vmax.f32 %v860, %v862
  %v895 = vmax.f32 %v863, %v865
  %v896 = vmax.f32 %v864, %v866
  %v897 = vmax.f32 %v867, %v869
  %v898 = vmax.f32 %v868, %v870
  %927 = vrot.lane.b32.xlu0 %v871, 44
  %v928 = vpop.permute.xlu0 %927
  %929 = vrot.lane.b32.xlu0 %v872, 44
  %v930 = vpop.permute.xlu0 %929
  %931 = vrot.lane.b32.xlu0 %v873, 44
  %v932 = vpop.permute.xlu0 %931
  %933 = vrot.lane.b32.xlu0 %v874, 44
  %v934 = vpop.permute.xlu0 %933
  %935 = vrot.lane.b32.xlu0 %v875, 44
  %v936 = vpop.permute.xlu0 %935
  %937 = vrot.lane.b32.xlu0 %v876, 44
  %v938 = vpop.permute.xlu0 %937
  %939 = vrot.lane.b32.xlu0 %v877, 44
  %v940 = vpop.permute.xlu0 %939
  %941 = vrot.lane.b32.xlu0 %v878, 44
  %v942 = vpop.permute.xlu0 %941
  %943 = vrot.lane.b32.xlu0 %v879, 44
  %v944 = vpop.permute.xlu0 %943
  %945 = vrot.lane.b32.xlu0 %v880, 44
  %v946 = vpop.permute.xlu0 %945
  %947 = vrot.lane.b32.xlu0 %v881, 44
  %v948 = vpop.permute.xlu0 %947
  %949 = vrot.lane.b32.xlu0 %v882, 44
  %v950 = vpop.permute.xlu0 %949
  %951 = vrot.lane.b32.xlu0 %v883, 44
  %v952 = vpop.permute.xlu0 %951
  %953 = vrot.lane.b32.xlu0 %v884, 44
  %v954 = vpop.permute.xlu0 %953
  %955 = vrot.lane.b32.xlu0 %v885, 44
  %v956 = vpop.permute.xlu0 %955
  %957 = vrot.lane.b32.xlu0 %v886, 44
  %v958 = vpop.permute.xlu0 %957
  %959 = vrot.lane.b32.xlu0 %v887, 44
  %v960 = vpop.permute.xlu0 %959
  %961 = vrot.lane.b32.xlu0 %v888, 44
  %v962 = vpop.permute.xlu0 %961
  %963 = vrot.lane.b32.xlu0 %v889, 44
  %v964 = vpop.permute.xlu0 %963
  %965 = vrot.lane.b32.xlu0 %v890, 44
  %v966 = vpop.permute.xlu0 %965
  %967 = vrot.lane.b32.xlu0 %v891, 44
  %v968 = vpop.permute.xlu0 %967
  %969 = vrot.lane.b32.xlu0 %v892, 44
  %v970 = vpop.permute.xlu0 %969
  %971 = vrot.lane.b32.xlu0 %v893, 44
  %v972 = vpop.permute.xlu0 %971
  %973 = vrot.lane.b32.xlu0 %v894, 44
  %v974 = vpop.permute.xlu0 %973
  %975 = vrot.lane.b32.xlu0 %v895, 44
  %v976 = vpop.permute.xlu0 %975
  %977 = vrot.lane.b32.xlu0 %v896, 44
  %v978 = vpop.permute.xlu0 %977
  %979 = vrot.lane.b32.xlu0 %v897, 44
  %v980 = vpop.permute.xlu0 %979
  %981 = vrot.lane.b32.xlu0 %v898, 44
  %v982 = vpop.permute.xlu0 %981
  %vm983 = vcmask 359424
  %v984 = vsel %vm983, %v928, %v930
  %v985 = vsel %vm983, %v932, %v934
  %v986 = vsel %vm983, %v936, %v938
  %v987 = vsel %vm983, %v940, %v942
  %v988 = vsel %vm983, %v944, %v946
  %v989 = vsel %vm983, %v948, %v950
  %v990 = vsel %vm983, %v952, %v954
  %v991 = vsel %vm983, %v956, %v958
  %v992 = vsel %vm983, %v960, %v962
  %v993 = vsel %vm983, %v964, %v966
  %v994 = vsel %vm983, %v968, %v970
  %v995 = vsel %vm983, %v972, %v974
  %v996 = vsel %vm983, %v976, %v978
  %v997 = vsel %vm983, %v980, %v982
  %v1012 = vmax.f32 %v871, %v984
  %v1013 = vmax.f32 %v873, %v985
  %v1014 = vmax.f32 %v875, %v986
  %v1015 = vmax.f32 %v877, %v987
  %v1016 = vmax.f32 %v879, %v988
  %v1017 = vmax.f32 %v881, %v989
  %v1018 = vmax.f32 %v883, %v990
  %v1019 = vmax.f32 %v885, %v991
  %v1020 = vmax.f32 %v887, %v992
  %v1021 = vmax.f32 %v889, %v993
  %v1022 = vmax.f32 %v891, %v994
  %v1023 = vmax.f32 %v893, %v995
  %v1024 = vmax.f32 %v895, %v996
  %v1025 = vmax.f32 %v897, %v997
  %1036 = vrot.lane.b32.xlu0 %v1013, 84
  %v1037 = vpop.permute.xlu0 %1036
  %1038 = vrot.lane.b32.xlu0 %v1014, 84
  %v1039 = vpop.permute.xlu0 %1038
  %1040 = vrot.lane.b32.xlu0 %v1015, 84
  %v1041 = vpop.permute.xlu0 %1040
  %1042 = vrot.lane.b32.xlu0 %v1016, 84
  %v1043 = vpop.permute.xlu0 %1042
  %1044 = vrot.lane.b32.xlu0 %v1017, 84
  %v1045 = vpop.permute.xlu0 %1044
  %1046 = vrot.lane.b32.xlu0 %v1018, 84
  %v1047 = vpop.permute.xlu0 %1046
  %1048 = vrot.lane.b32.xlu0 %v1019, 84
  %v1049 = vpop.permute.xlu0 %1048
  %1050 = vrot.lane.b32.xlu0 %v1020, 84
  %v1051 = vpop.permute.xlu0 %1050
  %1052 = vrot.lane.b32.xlu0 %v1021, 84
  %v1053 = vpop.permute.xlu0 %1052
  %1054 = vrot.lane.b32.xlu0 %v1022, 84
  %v1055 = vpop.permute.xlu0 %1054
  %1067 = vrot.lane.b32.xlu0 %v1014, 40
  %v1068 = vpop.permute.xlu0 %1067
  %1069 = vrot.lane.b32.xlu0 %v1015, 40
  %v1070 = vpop.permute.xlu0 %1069
  %1071 = vrot.lane.b32.xlu0 %v1016, 40
  %v1072 = vpop.permute.xlu0 %1071
  %1073 = vrot.lane.b32.xlu0 %v1017, 40
  %v1074 = vpop.permute.xlu0 %1073
  %1075 = vrot.lane.b32.xlu0 %v1018, 40
  %v1076 = vpop.permute.xlu0 %1075
  %1077 = vrot.lane.b32.xlu0 %v1019, 40
  %v1078 = vpop.permute.xlu0 %1077
  %1079 = vrot.lane.b32.xlu0 %v1020, 40
  %v1080 = vpop.permute.xlu0 %1079
  %1081 = vrot.lane.b32.xlu0 %v1021, 40
  %v1082 = vpop.permute.xlu0 %1081
  %1083 = vrot.lane.b32.xlu0 %v1022, 40
  %v1084 = vpop.permute.xlu0 %1083
  %1085 = vrot.lane.b32.xlu0 %v1023, 40
  %v1086 = vpop.permute.xlu0 %1085
  %1098 = vrot.lane.b32.xlu0 %v1015, 124
  %v1099 = vpop.permute.xlu0 %1098
  %1100 = vrot.lane.b32.xlu0 %v1016, 124
  %v1101 = vpop.permute.xlu0 %1100
  %1102 = vrot.lane.b32.xlu0 %v1017, 124
  %v1103 = vpop.permute.xlu0 %1102
  %1104 = vrot.lane.b32.xlu0 %v1018, 124
  %v1105 = vpop.permute.xlu0 %1104
  %1106 = vrot.lane.b32.xlu0 %v1019, 124
  %v1107 = vpop.permute.xlu0 %1106
  %1108 = vrot.lane.b32.xlu0 %v1020, 124
  %v1109 = vpop.permute.xlu0 %1108
  %1110 = vrot.lane.b32.xlu0 %v1021, 124
  %v1111 = vpop.permute.xlu0 %1110
  %1112 = vrot.lane.b32.xlu0 %v1022, 124
  %v1113 = vpop.permute.xlu0 %1112
  %1114 = vrot.lane.b32.xlu0 %v1023, 124
  %v1115 = vpop.permute.xlu0 %1114
  %1116 = vrot.lane.b32.xlu0 %v1024, 124
  %v1117 = vpop.permute.xlu0 %1116
  %1129 = vrot.lane.b32.xlu0 %v1016, 80
  %v1130 = vpop.permute.xlu0 %1129
  %1131 = vrot.lane.b32.xlu0 %v1017, 80
  %v1132 = vpop.permute.xlu0 %1131
  %1133 = vrot.lane.b32.xlu0 %v1018, 80
  %v1134 = vpop.permute.xlu0 %1133
  %1135 = vrot.lane.b32.xlu0 %v1019, 80
  %v1136 = vpop.permute.xlu0 %1135
  %1137 = vrot.lane.b32.xlu0 %v1020, 80
  %v1138 = vpop.permute.xlu0 %1137
  %1139 = vrot.lane.b32.xlu0 %v1021, 80
  %v1140 = vpop.permute.xlu0 %1139
  %1141 = vrot.lane.b32.xlu0 %v1022, 80
  %v1142 = vpop.permute.xlu0 %1141
  %1143 = vrot.lane.b32.xlu0 %v1023, 80
  %v1144 = vpop.permute.xlu0 %1143
  %1145 = vrot.lane.b32.xlu0 %v1024, 80
  %v1146 = vpop.permute.xlu0 %1145
  %1147 = vrot.lane.b32.xlu0 %v1025, 80
  %v1148 = vpop.permute.xlu0 %1147
  %vm1159 = vcmask 687104
  %v1160 = vsel %vm1159, %v1012, %v1037
  %v1161 = vsel %vm1159, %v1013, %v1039
  %v1162 = vsel %vm1159, %v1014, %v1041
  %v1163 = vsel %vm1159, %v1015, %v1043
  %v1164 = vsel %vm1159, %v1016, %v1045
  %v1165 = vsel %vm1159, %v1017, %v1047
  %v1166 = vsel %vm1159, %v1018, %v1049
  %v1167 = vsel %vm1159, %v1019, %v1051
  %v1168 = vsel %vm1159, %v1020, %v1053
  %v1169 = vsel %vm1159, %v1021, %v1055
  %vm1170 = vcmask 326656
  %v1171 = vsel %vm1170, %v1037, %v1068
  %v1172 = vsel %vm1170, %v1039, %v1070
  %v1173 = vsel %vm1170, %v1041, %v1072
  %v1174 = vsel %vm1170, %v1043, %v1074
  %v1175 = vsel %vm1170, %v1045, %v1076
  %v1176 = vsel %vm1170, %v1047, %v1078
  %v1177 = vsel %vm1170, %v1049, %v1080
  %v1178 = vsel %vm1170, %v1051, %v1082
  %v1179 = vsel %vm1170, %v1053, %v1084
  %v1180 = vsel %vm1170, %v1055, %v1086
  %vm1181 = vcmask 1014784
  %v1182 = vsel %vm1181, %v1171, %v1099
  %v1183 = vsel %vm1181, %v1172, %v1101
  %v1184 = vsel %vm1181, %v1173, %v1103
  %v1185 = vsel %vm1181, %v1174, %v1105
  %v1186 = vsel %vm1181, %v1175, %v1107
  %v1187 = vsel %vm1181, %v1176, %v1109
  %v1188 = vsel %vm1181, %v1177, %v1111
  %v1189 = vsel %vm1181, %v1178, %v1113
  %v1190 = vsel %vm1181, %v1179, %v1115
  %v1191 = vsel %vm1181, %v1180, %v1117
  %vm1192 = vcmask 654336
  %v1193 = vsel %vm1192, %v1099, %v1130
  %v1194 = vsel %vm1192, %v1101, %v1132
  %v1195 = vsel %vm1192, %v1103, %v1134
  %v1196 = vsel %vm1192, %v1105, %v1136
  %v1197 = vsel %vm1192, %v1107, %v1138
  %v1198 = vsel %vm1192, %v1109, %v1140
  %v1199 = vsel %vm1192, %v1111, %v1142
  %v1200 = vsel %vm1192, %v1113, %v1144
  %v1201 = vsel %vm1192, %v1115, %v1146
  %v1202 = vsel %vm1192, %v1117, %v1148
  %v1203 = vpack.c.bf16 %v1161, %v1160
  %v1204 = vpack.c.bf16 %v1183, %v1182
  %v1205 = vpack.c.bf16 %v1194, %v1193
  %v1206 = vpack.c.bf16 %v1132, %v1130
  %v1207 = vpack.c.bf16 %v1163, %v1162
  %v1208 = vpack.c.bf16 %v1185, %v1184
  %v1209 = vpack.c.bf16 %v1196, %v1195
  %v1210 = vpack.c.bf16 %v1136, %v1134
  %v1211 = vpack.c.bf16 %v1165, %v1164
  %v1212 = vpack.c.bf16 %v1187, %v1186
  %v1213 = vpack.c.bf16 %v1198, %v1197
  %v1214 = vpack.c.bf16 %v1140, %v1138
  %v1215 = vpack.c.bf16 %v1167, %v1166
  %v1216 = vpack.c.bf16 %v1189, %v1188
  %v1217 = vpack.c.bf16 %v1200, %v1199
  %v1218 = vpack.c.bf16 %v1144, %v1142
  %v1219 = vpack.c.bf16 %v1169, %v1168
  %v1220 = vpack.c.bf16 %v1191, %v1190
  %v1221 = vpack.c.bf16 %v1202, %v1201
  %v1222 = vpack.c.bf16 %v1148, %v1146
  %v1223 = vld [vmem:[%s3] sm:$0xff]
  %v1224 = vld [vmem:[%s3 + $0x8] sm:$0xff]
  %v1225 = vld [vmem:[%s3 + $0x10] sm:$0xff]
  %v1226 = vld [vmem:[%s3 + $0x18] sm:$0xff]
  %v1227 = vld [vmem:[%s3 + $0x20] sm:$0xff]
  %v1228 = vld [vmem:[%s3 + $0x28] sm:$0xff]
  %v1229 = vld [vmem:[%s3 + $0x30] sm:$0xff]
  %v1230 = vld [vmem:[%s3 + $0x38] sm:$0xff]
  %v1231 = vld [vmem:[%s3 + $0x40] sm:$0xff]
  %v1232 = vld [vmem:[%s3 + $0x48] sm:$0xff]
  %v1233 = vld [vmem:[%s3 + $0x50] sm:$0xff]
  %v1234 = vld [vmem:[%s3 + $0x58] sm:$0xff]
  %v1235 = vld [vmem:[%s3 + $0x60] sm:$0xff]
  %v1236 = vld [vmem:[%s3 + $0x68] sm:$0xff]
  %v1237 = vld [vmem:[%s3 + $0x70] sm:$0xff]
  %v1238 = vld [vmem:[%s3 + $0x78] sm:$0xff]
  %v1239 = vld [vmem:[%s3 + $0x80] sm:$0xff]
  %v1240 = vld [vmem:[%s3 + $0x88] sm:$0xff]
  %v1241 = vld [vmem:[%s3 + $0x90] sm:$0xff]
  %v1242 = vld [vmem:[%s3 + $0x98] sm:$0xff]
  %v1243 = vld [vmem:[%s3 + $0xa0] sm:$0xff]
  %v1244 = vld [vmem:[%s3 + $0xa8] sm:$0xff]
  %v1245 = vld [vmem:[%s3 + $0xb0] sm:$0xff]
  %v1246 = vld [vmem:[%s3 + $0xb8] sm:$0xff]
  %v1247 = vld [vmem:[%s3 + $0xc0] sm:$0xff]
  %v1248 = vld [vmem:[%s3 + $0xc8] sm:$0xff]
  %v1249 = vld [vmem:[%s3 + $0xd0] sm:$0xff]
  %v1250 = vld [vmem:[%s3 + $0xd8] sm:$0xff]
  %v1251 = vld [vmem:[%s3 + $0xe0] sm:$0xff]
  %v1252 = vld [vmem:[%s3 + $0xe8] sm:$0xff]
  %v1253 = vld [vmem:[%s3 + $0xf0] sm:$0xff]
  %v1254 = vld [vmem:[%s3 + $0xf8] sm:$0xff]
  %v1255 = vld [vmem:[%s3 + $0x100] sm:$0xff]
  %v1256 = vld [vmem:[%s3 + $0x108] sm:$0xff]
  %v1257 = vld [vmem:[%s3 + $0x110] sm:$0xff]
  %v1258 = vld [vmem:[%s3 + $0x118] sm:$0xff]
  %v1259 = vld [vmem:[%s3 + $0x120] sm:$0xff]
  %v1260 = vld [vmem:[%s3 + $0x128] sm:$0xff]
  %v1261 = vld [vmem:[%s3 + $0x130] sm:$0xff]
  %v1262 = vld [vmem:[%s3 + $0x138] sm:$0xff]
  %v1263 = vld [vmem:[%s3 + $0x140] sm:$0xff]
  %v1264 = vld [vmem:[%s3 + $0x148] sm:$0xff]
  %v1265 = vld [vmem:[%s3 + $0x150] sm:$0xff]
  %v1266 = vld [vmem:[%s3 + $0x158] sm:$0xff]
  %v1267 = vld [vmem:[%s3 + $0x160] sm:$0xff]
  %v1268 = vld [vmem:[%s3 + $0x168] sm:$0xff]
  %v1269 = vld [vmem:[%s3 + $0x170] sm:$0xff]
  %v1270 = vld [vmem:[%s3 + $0x178] sm:$0xff]
  %v1271 = vld [vmem:[%s3 + $0x180] sm:$0xff]
  %v1272 = vld [vmem:[%s3 + $0x188] sm:$0xff]
  %v1273 = vld [vmem:[%s3 + $0x190] sm:$0xff]
  %v1274 = vld [vmem:[%s3 + $0x198] sm:$0xff]
  %v1275 = vld [vmem:[%s3 + $0x1a0] sm:$0x33]
  %v1276 = vld [vmem:[%s4] sm:$0x3]
  %v1278 = vlaneseq
  %v1279 = vshrl.u32 %v1278, 7
  %v1280 = vsub.s32 0, %v1279
  %v1281 = vrot.slane %v1276, %v1280
  %v1282 = vlaneseq
  %v1283 = vshrl.u32 %v1282, 7
  %v1284 = vsub.s32 1, %v1283
  %v1285 = vrot.slane %v1276, %v1284
  %v1341 = vunpack.c.l.b16 %v1223
  %v1342 = vunpack.c.h.b16 %v1223
  %v1343 = vunpack.c.l.b16 %v1224
  %v1344 = vunpack.c.h.b16 %v1224
  %v1345 = vunpack.c.l.b16 %v1225
  %v1346 = vunpack.c.h.b16 %v1225
  %v1347 = vunpack.c.l.b16 %v1226
  %v1348 = vunpack.c.h.b16 %v1226
  %v1349 = vunpack.c.l.b16 %v1227
  %v1350 = vunpack.c.h.b16 %v1227
  %v1351 = vunpack.c.l.b16 %v1228
  %v1352 = vunpack.c.h.b16 %v1228
  %v1353 = vunpack.c.l.b16 %v1229
  %v1354 = vunpack.c.h.b16 %v1229
  %v1355 = vunpack.c.l.b16 %v1230
  %v1356 = vunpack.c.h.b16 %v1230
  %v1357 = vunpack.c.l.b16 %v1231
  %v1358 = vunpack.c.h.b16 %v1231
  %v1359 = vunpack.c.l.b16 %v1232
  %v1360 = vunpack.c.h.b16 %v1232
  %v1361 = vunpack.c.l.b16 %v1233
  %v1362 = vunpack.c.h.b16 %v1233
  %v1363 = vunpack.c.l.b16 %v1234
  %v1364 = vunpack.c.h.b16 %v1234
  %v1365 = vunpack.c.l.b16 %v1235
  %v1366 = vunpack.c.h.b16 %v1235
  %v1367 = vunpack.c.l.b16 %v1236
  %v1368 = vunpack.c.h.b16 %v1236
  %v1369 = vunpack.c.l.b16 %v1237
  %v1370 = vunpack.c.h.b16 %v1237
  %v1371 = vunpack.c.l.b16 %v1238
  %v1372 = vunpack.c.h.b16 %v1238
  %v1373 = vunpack.c.l.b16 %v1239
  %v1374 = vunpack.c.h.b16 %v1239
  %v1375 = vunpack.c.l.b16 %v1240
  %v1376 = vunpack.c.h.b16 %v1240
  %v1377 = vunpack.c.l.b16 %v1241
  %v1378 = vunpack.c.h.b16 %v1241
  %v1379 = vunpack.c.l.b16 %v1242
  %v1380 = vunpack.c.h.b16 %v1242
  %v1381 = vunpack.c.l.b16 %v1243
  %v1382 = vunpack.c.h.b16 %v1243
  %v1383 = vunpack.c.l.b16 %v1244
  %v1384 = vunpack.c.h.b16 %v1244
  %v1385 = vunpack.c.l.b16 %v1245
  %v1386 = vunpack.c.h.b16 %v1245
  %v1387 = vunpack.c.l.b16 %v1246
  %v1388 = vunpack.c.h.b16 %v1246
  %v1389 = vunpack.c.l.b16 %v1247
  %v1390 = vunpack.c.h.b16 %v1247
  %v1391 = vunpack.c.l.b16 %v1248
  %v1392 = vunpack.c.h.b16 %v1248
  %v1393 = vunpack.c.l.b16 %v1249
  %v1394 = vunpack.c.h.b16 %v1249
  %v1395 = vunpack.c.l.b16 %v1250
  %v1396 = vunpack.c.h.b16 %v1250
  %v1397 = vunpack.c.l.b16 %v1251
  %v1398 = vunpack.c.h.b16 %v1251
  %v1399 = vunpack.c.l.b16 %v1252
  %v1400 = vunpack.c.h.b16 %v1252
  %v1401 = vunpack.c.l.b16 %v1253
  %v1402 = vunpack.c.h.b16 %v1253
  %v1403 = vunpack.c.l.b16 %v1254
  %v1404 = vunpack.c.h.b16 %v1254
  %v1405 = vunpack.c.l.b16 %v1255
  %v1406 = vunpack.c.h.b16 %v1255
  %v1407 = vunpack.c.l.b16 %v1256
  %v1408 = vunpack.c.h.b16 %v1256
  %v1409 = vunpack.c.l.b16 %v1257
  %v1410 = vunpack.c.h.b16 %v1257
  %v1411 = vunpack.c.l.b16 %v1258
  %v1412 = vunpack.c.h.b16 %v1258
  %v1413 = vunpack.c.l.b16 %v1259
  %v1414 = vunpack.c.h.b16 %v1259
  %v1415 = vunpack.c.l.b16 %v1260
  %v1416 = vunpack.c.h.b16 %v1260
  %v1417 = vunpack.c.l.b16 %v1261
  %v1418 = vunpack.c.h.b16 %v1261
  %v1419 = vunpack.c.l.b16 %v1262
  %v1420 = vunpack.c.h.b16 %v1262
  %v1421 = vunpack.c.l.b16 %v1263
  %v1422 = vunpack.c.h.b16 %v1263
  %v1423 = vunpack.c.l.b16 %v1264
  %v1424 = vunpack.c.h.b16 %v1264
  %v1425 = vunpack.c.l.b16 %v1265
  %v1426 = vunpack.c.h.b16 %v1265
  %v1427 = vunpack.c.l.b16 %v1266
  %v1428 = vunpack.c.h.b16 %v1266
  %v1429 = vunpack.c.l.b16 %v1267
  %v1430 = vunpack.c.h.b16 %v1267
  %v1431 = vunpack.c.l.b16 %v1268
  %v1432 = vunpack.c.h.b16 %v1268
  %v1433 = vunpack.c.l.b16 %v1269
  %v1434 = vunpack.c.h.b16 %v1269
  %v1435 = vunpack.c.l.b16 %v1270
  %v1436 = vunpack.c.h.b16 %v1270
  %v1437 = vunpack.c.l.b16 %v1271
  %v1438 = vunpack.c.h.b16 %v1271
  %v1439 = vunpack.c.l.b16 %v1272
  %v1440 = vunpack.c.h.b16 %v1272
  %v1441 = vunpack.c.l.b16 %v1273
  %v1442 = vunpack.c.h.b16 %v1273
  %v1443 = vunpack.c.l.b16 %v1274
  %v1444 = vunpack.c.h.b16 %v1274
  %v1445 = vunpack.c.l.b16 %v1275
  %v1446 = vunpack.c.h.b16 %v1275
  %v1447 = vpack.c.b16 %v1343, %v1341
  %v1448 = vpack.c.b16 %v1344, %v1342
  %v1449 = vpack.c.b16 %v1347, %v1345
  %v1450 = vpack.c.b16 %v1348, %v1346
  %v1451 = vpack.c.b16 %v1351, %v1349
  %v1452 = vpack.c.b16 %v1352, %v1350
  %v1453 = vpack.c.b16 %v1355, %v1353
  %v1454 = vpack.c.b16 %v1356, %v1354
  %v1455 = vpack.c.b16 %v1359, %v1357
  %v1456 = vpack.c.b16 %v1360, %v1358
  %v1457 = vpack.c.b16 %v1363, %v1361
  %v1458 = vpack.c.b16 %v1364, %v1362
  %v1459 = vpack.c.b16 %v1367, %v1365
  %v1460 = vpack.c.b16 %v1368, %v1366
  %v1461 = vpack.c.b16 %v1371, %v1369
  %v1462 = vpack.c.b16 %v1372, %v1370
  %v1463 = vpack.c.b16 %v1375, %v1373
  %v1464 = vpack.c.b16 %v1376, %v1374
  %v1465 = vpack.c.b16 %v1379, %v1377
  %v1466 = vpack.c.b16 %v1380, %v1378
  %v1467 = vpack.c.b16 %v1383, %v1381
  %v1468 = vpack.c.b16 %v1384, %v1382
  %v1469 = vpack.c.b16 %v1387, %v1385
  %v1470 = vpack.c.b16 %v1388, %v1386
  %v1471 = vpack.c.b16 %v1391, %v1389
  %v1472 = vpack.c.b16 %v1392, %v1390
  %v1473 = vpack.c.b16 %v1395, %v1393
  %v1474 = vpack.c.b16 %v1396, %v1394
  %v1475 = vpack.c.b16 %v1399, %v1397
  %v1476 = vpack.c.b16 %v1400, %v1398
  %v1477 = vpack.c.b16 %v1403, %v1401
  %v1478 = vpack.c.b16 %v1404, %v1402
  %v1479 = vpack.c.b16 %v1407, %v1405
  %v1480 = vpack.c.b16 %v1408, %v1406
  %v1481 = vpack.c.b16 %v1411, %v1409
  %v1482 = vpack.c.b16 %v1412, %v1410
  %v1483 = vpack.c.b16 %v1415, %v1413
  %v1484 = vpack.c.b16 %v1416, %v1414
  %v1485 = vpack.c.b16 %v1419, %v1417
  %v1486 = vpack.c.b16 %v1420, %v1418
  %v1487 = vpack.c.b16 %v1423, %v1421
  %v1488 = vpack.c.b16 %v1424, %v1422
  %v1489 = vpack.c.b16 %v1427, %v1425
  %v1490 = vpack.c.b16 %v1428, %v1426
  %v1491 = vpack.c.b16 %v1431, %v1429
  %v1492 = vpack.c.b16 %v1432, %v1430
  %v1493 = vpack.c.b16 %v1435, %v1433
  %v1494 = vpack.c.b16 %v1436, %v1434
  %v1495 = vpack.c.b16 %v1439, %v1437
  %v1496 = vpack.c.b16 %v1440, %v1438
  %v1497 = vpack.c.b16 %v1443, %v1441
  %v1498 = vpack.c.b16 %v1444, %v1442
  %v1499 = vpack.c.b16 %v1445, %v1445
  %v1500 = vpack.c.b16 %v1446, %v1446
  %vm1553 = vcmask 293888
  %v1555 = vsel %vm1553, %v1206, 0
  %v1558 = vsel %vm1553, %v1210, 0
  %v1561 = vsel %vm1553, %v1214, 0
  %v1564 = vsel %vm1553, %v1218, 0
  %v1567 = vsel %vm1553, %v1222, 0
  %vm1569 = vcmask 1041408
  %v1571 = vsel %vm1569, %v1499, 0
  %v1574 = vsel %vm1569, %v1500, 0
  %1576 = vmatprep.subr.bf16.mxu0 %v1448
  %1577 = vmatpush1.bf16.msra.mxu0 %v1447
  %1578 = vmatprep.subr.bf16.mxu0 %v1450
  %1579 = vmatpush1.bf16.msra.mxu0 %v1449
  %1580 = vmatprep.subr.bf16.mxu0 %v1452
  %1581 = vmatpush1.bf16.msra.mxu0 %v1451
  %1582 = vmatprep.subr.bf16.mxu0 %v1454
  %1583 = vmatpush1.bf16.msra.mxu0 %v1453
  %1584 = vmatprep.subr.bf16.mxu0 %v1456
  %1585 = vmatpush1.bf16.msra.mxu0 %v1455
  %1586 = vmatprep.subr.bf16.mxu0 %v1458
  %1587 = vmatpush1.bf16.msra.mxu0 %v1457
  %1588 = vmatprep.subr.bf16.mxu0 %v1460
  %1589 = vmatpush1.bf16.msra.mxu0 %v1459
  %1590 = vmatprep.subr.bf16.mxu0 %v1462
  %1591 = vmatpush1.bf16.msra.mxu0 %v1461
  %1592 = vmatprep.subr.bf16.mxu0 %v1464
  %1593 = vmatpush1.bf16.msra.mxu0 %v1463
  %1594 = vmatprep.subr.bf16.mxu0 %v1466
  %1595 = vmatpush1.bf16.msra.mxu0 %v1465
  %1596 = vmatprep.subr.bf16.mxu0 %v1468
  %1597 = vmatpush1.bf16.msra.mxu0 %v1467
  %1598 = vmatprep.subr.bf16.mxu0 %v1470
  %1599 = vmatpush1.bf16.msra.mxu0 %v1469
  %1600 = vmatprep.subr.bf16.mxu0 %v1472
  %1601 = vmatpush1.bf16.msra.mxu0 %v1471
  %1602 = vmatprep.subr.bf16.mxu0 %v1474
  %1603 = vmatpush1.bf16.msra.mxu0 %v1473
  %1604 = vmatprep.subr.bf16.mxu0 %v1476
  %1605 = vmatpush1.bf16.msra.mxu0 %v1475
  %1606 = vmatprep.subr.bf16.mxu0 %v1478
  %1607 = vmatpush1.bf16.msra.mxu0 %v1477
  %1608 = vmatprep.mubr.bf16.mxu0 %v1204
  %1609 = vmatmul.mubr.bf16.gmra.mrb[0].mxu0 %v1203
  %v1610 = vpop.f32.mrb[0].mxu0
  %v1611 = vadd.f32 %v1281, %v1610
  %v1612 = vpop.f32.mrb[0].mxu0
  %v1613 = vadd.f32 %v1285, %v1612
  %v1614 = vpop.f32.mrb[0].mxu0
  %v1615 = vadd.f32 %v1281, %v1614
  %v1616 = vpop.f32.mrb[0].mxu0
  %v1617 = vadd.f32 %v1285, %v1616
  %1618 = vmatprep.mubr.bf16.mxu0 %v1208
  %1619 = vmatmul.mubr.bf16.gmra.mrb[0].mxu0 %v1207
  %v1620 = vpop.f32.mrb[0].mxu0
  %v1621 = vadd.f32 %v1281, %v1620
  %v1622 = vpop.f32.mrb[0].mxu0
  %v1623 = vadd.f32 %v1285, %v1622
  %v1624 = vpop.f32.mrb[0].mxu0
  %v1625 = vadd.f32 %v1281, %v1624
  %v1626 = vpop.f32.mrb[0].mxu0
  %v1627 = vadd.f32 %v1285, %v1626
  %1628 = vmatprep.mubr.bf16.mxu0 %v1212
  %1629 = vmatmul.mubr.bf16.gmra.mrb[0].mxu0 %v1211
  %v1630 = vpop.f32.mrb[0].mxu0
  %v1631 = vadd.f32 %v1281, %v1630
  %v1632 = vpop.f32.mrb[0].mxu0
  %v1633 = vadd.f32 %v1285, %v1632
  %v1634 = vpop.f32.mrb[0].mxu0
  %v1635 = vadd.f32 %v1281, %v1634
  %v1636 = vpop.f32.mrb[0].mxu0
  %v1637 = vadd.f32 %v1285, %v1636
  %1638 = vmatprep.mubr.bf16.mxu0 %v1216
  %1639 = vmatmul.mubr.bf16.gmra.mrb[0].mxu0 %v1215
  %v1640 = vpop.f32.mrb[0].mxu0
  %v1641 = vadd.f32 %v1281, %v1640
  %v1642 = vpop.f32.mrb[0].mxu0
  %v1643 = vadd.f32 %v1285, %v1642
  %v1644 = vpop.f32.mrb[0].mxu0
  %v1645 = vadd.f32 %v1281, %v1644
  %v1646 = vpop.f32.mrb[0].mxu0
  %v1647 = vadd.f32 %v1285, %v1646
  %1648 = vmatprep.mubr.bf16.mxu0 %v1220
  %1649 = vmatmul.mubr.bf16.gmra.mrb[0].mxu0 %v1219
  %v1650 = vpop.f32.mrb[0].mxu0
  %v1651 = vadd.f32 %v1281, %v1650
  %v1652 = vpop.f32.mrb[0].mxu0
  %v1653 = vadd.f32 %v1285, %v1652
  %v1654 = vpop.f32.mrb[0].mxu0
  %v1655 = vadd.f32 %v1281, %v1654
  %v1656 = vpop.f32.mrb[0].mxu0
  %v1657 = vadd.f32 %v1285, %v1656
  %1658 = vdwg.mxu0
  %1659 = vmatprep.subr.bf16.mxu0 %v1480
  %1660 = vmatpush1.bf16.msra.mxu0 %v1479
  %1661 = vmatprep.subr.bf16.mxu0 %v1482
  %1662 = vmatpush1.bf16.msra.mxu0 %v1481
  %1663 = vmatprep.subr.bf16.mxu0 %v1484
  %1664 = vmatpush1.bf16.msra.mxu0 %v1483
  %1665 = vmatprep.subr.bf16.mxu0 %v1486
  %1666 = vmatpush1.bf16.msra.mxu0 %v1485
  %1667 = vmatprep.subr.bf16.mxu0 %v1488
  %1668 = vmatpush1.bf16.msra.mxu0 %v1487
  %1669 = vmatprep.subr.bf16.mxu0 %v1490
  %1670 = vmatpush1.bf16.msra.mxu0 %v1489
  %1671 = vmatprep.subr.bf16.mxu0 %v1492
  %1672 = vmatpush1.bf16.msra.mxu0 %v1491
  %1673 = vmatprep.subr.bf16.mxu0 %v1494
  %1674 = vmatpush1.bf16.msra.mxu0 %v1493
  %1675 = vmatprep.subr.bf16.mxu0 %v1496
  %1676 = vmatpush1.bf16.msra.mxu0 %v1495
  %1677 = vmatprep.subr.bf16.mxu0 %v1498
  %1678 = vmatpush1.bf16.msra.mxu0 %v1497
  %1679 = vmatprep.subr.bf16.mxu0 %v1574
  %1680 = vmatpush1.bf16.msra.mxu0 %v1571
  %1681 = vmatprep.subr.bf16.mxu0 0
  %1682 = vmatpush1.bf16.msra.mxu0 0
  %1683 = vmatprep.subr.bf16.mxu0 0
  %1684 = vmatpush1.bf16.msra.mxu0 0
  %1685 = vmatprep.subr.bf16.mxu0 0
  %1686 = vmatpush1.bf16.msra.mxu0 0
  %1687 = vmatprep.subr.bf16.mxu0 0
  %1688 = vmatpush1.bf16.msra.mxu0 0
  %1689 = vmatprep.subr.bf16.mxu0 0
  %1690 = vmatpush1.bf16.msra.mxu0 0
  %1691 = vmatprep.mubr.bf16.mxu0 %v1555
  %1692 = vmatmul.mubr.bf16.gmra.mrb[0].mxu0 %v1205
  %v1693 = vpop.f32.mrb[0].mxu0
  %v1694 = vadd.f32 %v1611, %v1693
  %v1695 = vpop.f32.mrb[0].mxu0
  %v1696 = vadd.f32 %v1613, %v1695
  %v1697 = vpop.f32.mrb[0].mxu0
  %v1698 = vadd.f32 %v1615, %v1697
  %v1699 = vpop.f32.mrb[0].mxu0
  %v1700 = vadd.f32 %v1617, %v1699
  %1701 = vmatprep.mubr.bf16.mxu0 %v1558
  %1702 = vmatmul.mubr.bf16.gmra.mrb[0].mxu0 %v1209
  %v1703 = vpop.f32.mrb[0].mxu0
  %v1704 = vadd.f32 %v1621, %v1703
  %v1705 = vpop.f32.mrb[0].mxu0
  %v1706 = vadd.f32 %v1623, %v1705
  %v1707 = vpop.f32.mrb[0].mxu0
  %v1708 = vadd.f32 %v1625, %v1707
  %v1709 = vpop.f32.mrb[0].mxu0
  %v1710 = vadd.f32 %v1627, %v1709
  %1711 = vmatprep.mubr.bf16.mxu0 %v1561
  %1712 = vmatmul.mubr.bf16.gmra.mrb[0].mxu0 %v1213
  %v1713 = vpop.f32.mrb[0].mxu0
  %v1714 = vadd.f32 %v1631, %v1713
  %v1715 = vpop.f32.mrb[0].mxu0
  %v1716 = vadd.f32 %v1633, %v1715
  %v1717 = vpop.f32.mrb[0].mxu0
  %v1718 = vadd.f32 %v1635, %v1717
  %v1719 = vpop.f32.mrb[0].mxu0
  %v1720 = vadd.f32 %v1637, %v1719
  %1721 = vmatprep.mubr.bf16.mxu0 %v1564
  %1722 = vmatmul.mubr.bf16.gmra.mrb[0].mxu0 %v1217
  %v1723 = vpop.f32.mrb[0].mxu0
  %v1724 = vadd.f32 %v1641, %v1723
  %v1725 = vpop.f32.mrb[0].mxu0
  %v1726 = vadd.f32 %v1643, %v1725
  %v1727 = vpop.f32.mrb[0].mxu0
  %v1728 = vadd.f32 %v1645, %v1727
  %v1729 = vpop.f32.mrb[0].mxu0
  %v1730 = vadd.f32 %v1647, %v1729
  %1731 = vmatprep.mubr.bf16.mxu0 %v1567
  %1732 = vmatmul.mubr.bf16.gmra.mrb[0].mxu0 %v1221
  %v1733 = vpop.f32.mrb[0].mxu0
  %v1734 = vadd.f32 %v1651, %v1733
  %v1735 = vpop.f32.mrb[0].mxu0
  %v1736 = vadd.f32 %v1653, %v1735
  %v1737 = vpop.f32.mrb[0].mxu0
  %v1738 = vadd.f32 %v1655, %v1737
  %v1739 = vpop.f32.mrb[0].mxu0
  %v1740 = vadd.f32 %v1657, %v1739
  %1741 = vdwg.mxu0
  %v1742 = vmax.f32 %v1694, 0.0
  %v1743 = vmax.f32 %v1696, 0.0
  %v1744 = vmax.f32 %v1698, 0.0
  %v1745 = vmax.f32 %v1700, 0.0
  %v1746 = vmax.f32 %v1704, 0.0
  %v1747 = vmax.f32 %v1706, 0.0
  %v1748 = vmax.f32 %v1708, 0.0
  %v1749 = vmax.f32 %v1710, 0.0
  %v1750 = vmax.f32 %v1714, 0.0
  %v1751 = vmax.f32 %v1716, 0.0
  %v1752 = vmax.f32 %v1718, 0.0
  %v1753 = vmax.f32 %v1720, 0.0
  %v1754 = vmax.f32 %v1724, 0.0
  %v1755 = vmax.f32 %v1726, 0.0
  %v1756 = vmax.f32 %v1728, 0.0
  %v1757 = vmax.f32 %v1730, 0.0
  %v1758 = vmax.f32 %v1734, 0.0
  %v1759 = vmax.f32 %v1736, 0.0
  %v1760 = vmax.f32 %v1738, 0.0
  %v1761 = vmax.f32 %v1740, 0.0
  %v1762 = vmax.f32 %v1742, %v1744
  %v1763 = vmax.f32 %v1743, %v1745
  %v1764 = vmax.f32 %v1746, %v1748
  %v1765 = vmax.f32 %v1747, %v1749
  %v1766 = vmax.f32 %v1750, %v1752
  %v1767 = vmax.f32 %v1751, %v1753
  %v1768 = vmax.f32 %v1754, %v1756
  %v1769 = vmax.f32 %v1755, %v1757
  %v1770 = vmax.f32 %v1758, %v1760
  %v1771 = vmax.f32 %v1759, %v1761
  %1782 = vrot.lane.b32.xlu0 %v1762, 48
  %v1783 = vpop.permute.xlu0 %1782
  %1784 = vrot.lane.b32.xlu0 %v1763, 48
  %v1785 = vpop.permute.xlu0 %1784
  %1786 = vrot.lane.b32.xlu0 %v1764, 48
  %v1787 = vpop.permute.xlu0 %1786
  %1788 = vrot.lane.b32.xlu0 %v1765, 48
  %v1789 = vpop.permute.xlu0 %1788
  %1790 = vrot.lane.b32.xlu0 %v1766, 48
  %v1791 = vpop.permute.xlu0 %1790
  %1792 = vrot.lane.b32.xlu0 %v1767, 48
  %v1793 = vpop.permute.xlu0 %1792
  %1794 = vrot.lane.b32.xlu0 %v1768, 48
  %v1795 = vpop.permute.xlu0 %1794
  %1796 = vrot.lane.b32.xlu0 %v1769, 48
  %v1797 = vpop.permute.xlu0 %1796
  %1798 = vrot.lane.b32.xlu0 %v1770, 48
  %v1799 = vpop.permute.xlu0 %1798
  %1800 = vrot.lane.b32.xlu0 %v1771, 48
  %v1801 = vpop.permute.xlu0 %1800
  %vm1802 = vcmask 392192
  %v1803 = vsel %vm1802, %v1783, %v1785
  %v1804 = vsel %vm1802, %v1787, %v1789
  %v1805 = vsel %vm1802, %v1791, %v1793
  %v1806 = vsel %vm1802, %v1795, %v1797
  %v1807 = vsel %vm1802, %v1799, %v1801
  %v1813 = vmax.f32 %v1762, %v1803
  %v1814 = vmax.f32 %v1764, %v1804
  %v1815 = vmax.f32 %v1766, %v1805
  %v1816 = vmax.f32 %v1768, %v1806
  %v1817 = vmax.f32 %v1770, %v1807
  %1819 = vrot.lane.b32.xlu0 %v1814, 80
  %v1820 = vpop.permute.xlu0 %1819
  %1823 = vrot.lane.b32.xlu0 %v1815, 32
  %v1824 = vpop.permute.xlu0 %1823
  %1827 = vrot.lane.b32.xlu0 %v1816, 112
  %v1828 = vpop.permute.xlu0 %1827
  %1831 = vrot.lane.b32.xlu0 %v1817, 64
  %v1832 = vpop.permute.xlu0 %1831
  %v1834 = vsel %vm1192, %v1813, %v1820
  %v1835 = vsel %vm353, %v1820, %v1824
  %vm1836 = vcmask 916480
  %v1837 = vsel %vm1836, %v1835, %v1828
  %v1838 = vsel %vm382, %v1828, %v1832
  %v1839 = vpack.c.bf16 %v1834, %v1834
  %v1840 = vpack.c.bf16 %v1837, %v1837
  %v1841 = vpack.c.bf16 %v1838, %v1838
  %v1842 = vpack.c.bf16 %v1832, %v1832
  %v1843 = vld [vmem:[%s5] sm:$0xf]
  %v1844 = vld [vmem:[%s5 + $0x4] sm:$0xf]
  %v1845 = vld [vmem:[%s5 + $0x8] sm:$0xf]
  %v1846 = vld [vmem:[%s5 + $0xc] sm:$0xf]
  %v1847 = vld [vmem:[%s5 + $0x10] sm:$0xf]
  %v1848 = vld [vmem:[%s5 + $0x14] sm:$0xf]
  %v1849 = vld [vmem:[%s5 + $0x18] sm:$0xf]
  %v1850 = vld [vmem:[%s5 + $0x1c] sm:$0xf]
  %v1851 = vld [vmem:[%s5 + $0x20] sm:$0xf]
  %v1852 = vld [vmem:[%s5 + $0x24] sm:$0xf]
  %v1853 = vld [vmem:[%s5 + $0x28] sm:$0xf]
  %v1854 = vld [vmem:[%s5 + $0x2c] sm:$0xf]
  %v1855 = vld [vmem:[%s5 + $0x30] sm:$0xf]
  %v1856 = vld [vmem:[%s5 + $0x34] sm:$0xf]
  %v1857 = vld [vmem:[%s5 + $0x38] sm:$0xf]
  %v1858 = vld [vmem:[%s5 + $0x3c] sm:$0xf]
  %v1859 = vld [vmem:[%s5 + $0x40] sm:$0xf]
  %v1860 = vld [vmem:[%s5 + $0x44] sm:$0xf]
  %v1861 = vld [vmem:[%s5 + $0x48] sm:$0xf]
  %v1862 = vld [vmem:[%s5 + $0x4c] sm:$0xf]
  %v1863 = vld [vmem:[%s5 + $0x50] sm:$0xf]
  %v1864 = vld [vmem:[%s5 + $0x54] sm:$0xf]
  %v1865 = vld [vmem:[%s5 + $0x58] sm:$0xf]
  %v1866 = vld [vmem:[%s5 + $0x5c] sm:$0xf]
  %v1867 = vld [vmem:[%s5 + $0x60] sm:$0xf]
  %v1868 = vld [vmem:[%s5 + $0x64] sm:$0xf]
  %v1869 = vld [vmem:[%s5 + $0x68] sm:$0xf]
  %v1870 = vld [vmem:[%s5 + $0x6c] sm:$0xf]
  %v1871 = vld [vmem:[%s5 + $0x70] sm:$0xf]
  %v1872 = vld [vmem:[%s5 + $0x74] sm:$0xf]
  %v1873 = vld [vmem:[%s5 + $0x78] sm:$0xf]
  %v1874 = vld [vmem:[%s5 + $0x7c] sm:$0xf]
  %v1875 = vld [vmem:[%s5 + $0x80] sm:$0xf]
  %v1876 = vld [vmem:[%s5 + $0x84] sm:$0xf]
  %v1877 = vld [vmem:[%s5 + $0x88] sm:$0xf]
  %v1878 = vld [vmem:[%s5 + $0x8c] sm:$0xf]
  %v1879 = vld [vmem:[%s5 + $0x90] sm:$0xf]
  %v1880 = vld [vmem:[%s5 + $0x94] sm:$0xf]
  %v1881 = vld [vmem:[%s5 + $0x98] sm:$0xf]
  %v1882 = vld [vmem:[%s5 + $0x9c] sm:$0xf]
  %v1883 = vld [vmem:[%s5 + $0xa0] sm:$0xf]
  %v1884 = vld [vmem:[%s5 + $0xa4] sm:$0xf]
  %v1885 = vld [vmem:[%s5 + $0xa8] sm:$0xf]
  %v1886 = vld [vmem:[%s5 + $0xac] sm:$0xf]
  %v1887 = vld [vmem:[%s5 + $0xb0] sm:$0xf]
  %v1888 = vld [vmem:[%s5 + $0xb4] sm:$0xf]
  %v1889 = vld [vmem:[%s5 + $0xb8] sm:$0xf]
  %v1890 = vld [vmem:[%s5 + $0xbc] sm:$0xf]
  %v1891 = vld [vmem:[%s5 + $0xc0] sm:$0xf]
  %v1892 = vld [vmem:[%s5 + $0xc4] sm:$0xf]
  %v1893 = vld [vmem:[%s6] sm:$0x1]
  %v1895 = vlaneseq
  %v1896 = vshrl.u32 %v1895, 7
  %v1897 = vsub.s32 0, %v1896
  %v1898 = vrot.slane %v1893, %v1897
  %v1950 = vunpack.c.l.b16 %v1843
  %v1951 = vunpack.c.l.b16 %v1844
  %v1952 = vunpack.c.l.b16 %v1845
  %v1953 = vunpack.c.l.b16 %v1846
  %v1954 = vunpack.c.l.b16 %v1847
  %v1955 = vunpack.c.l.b16 %v1848
  %v1956 = vunpack.c.l.b16 %v1849
  %v1957 = vunpack.c.l.b16 %v1850
  %v1958 = vunpack.c.l.b16 %v1851
  %v1959 = vunpack.c.l.b16 %v1852
  %v1960 = vunpack.c.l.b16 %v1853
  %v1961 = vunpack.c.l.b16 %v1854
  %v1962 = vunpack.c.l.b16 %v1855
  %v1963 = vunpack.c.l.b16 %v1856
  %v1964 = vunpack.c.l.b16 %v1857
  %v1965 = vunpack.c.l.b16 %v1858
  %v1966 = vunpack.c.l.b16 %v1859
  %v1967 = vunpack.c.l.b16 %v1860
  %v1968 = vunpack.c.l.b16 %v1861
  %v1969 = vunpack.c.l.b16 %v1862
  %v1970 = vunpack.c.l.b16 %v1863
  %v1971 = vunpack.c.l.b16 %v1864
  %v1972 = vunpack.c.l.b16 %v1865
  %v1973 = vunpack.c.l.b16 %v1866
  %v1974 = vunpack.c.l.b16 %v1867
  %v1975 = vunpack.c.l.b16 %v1868
  %v1976 = vunpack.c.l.b16 %v1869
  %v1977 = vunpack.c.l.b16 %v1870
  %v1978 = vunpack.c.l.b16 %v1871
  %v1979 = vunpack.c.l.b16 %v1872
  %v1980 = vunpack.c.l.b16 %v1873
  %v1981 = vunpack.c.l.b16 %v1874
  %v1982 = vunpack.c.l.b16 %v1875
  %v1983 = vunpack.c.l.b16 %v1876
  %v1984 = vunpack.c.l.b16 %v1877
  %v1985 = vunpack.c.l.b16 %v1878
  %v1986 = vunpack.c.l.b16 %v1879
  %v1987 = vunpack.c.l.b16 %v1880
  %v1988 = vunpack.c.l.b16 %v1881
  %v1989 = vunpack.c.l.b16 %v1882
  %v1990 = vunpack.c.l.b16 %v1883
  %v1991 = vunpack.c.l.b16 %v1884
  %v1992 = vunpack.c.l.b16 %v1885
  %v1993 = vunpack.c.l.b16 %v1886
  %v1994 = vunpack.c.l.b16 %v1887
  %v1995 = vunpack.c.l.b16 %v1888
  %v1996 = vunpack.c.l.b16 %v1889
  %v1997 = vunpack.c.l.b16 %v1890
  %v1998 = vunpack.c.l.b16 %v1891
  %v1999 = vunpack.c.l.b16 %v1892
  %v2000 = vpack.c.b16 %v1951, %v1950
  %v2001 = vpack.c.b16 %v1953, %v1952
  %v2002 = vpack.c.b16 %v1955, %v1954
  %v2003 = vpack.c.b16 %v1957, %v1956
  %v2004 = vpack.c.b16 %v1959, %v1958
  %v2005 = vpack.c.b16 %v1961, %v1960
  %v2006 = vpack.c.b16 %v1963, %v1962
  %v2007 = vpack.c.b16 %v1965, %v1964
  %v2008 = vpack.c.b16 %v1967, %v1966
  %v2009 = vpack.c.b16 %v1969, %v1968
  %v2010 = vpack.c.b16 %v1971, %v1970
  %v2011 = vpack.c.b16 %v1973, %v1972
  %v2012 = vpack.c.b16 %v1975, %v1974
  %v2013 = vpack.c.b16 %v1977, %v1976
  %v2014 = vpack.c.b16 %v1979, %v1978
  %v2015 = vpack.c.b16 %v1981, %v1980
  %v2016 = vpack.c.b16 %v1983, %v1982
  %v2017 = vpack.c.b16 %v1985, %v1984
  %v2018 = vpack.c.b16 %v1987, %v1986
  %v2019 = vpack.c.b16 %v1989, %v1988
  %v2020 = vpack.c.b16 %v1991, %v1990
  %v2021 = vpack.c.b16 %v1993, %v1992
  %v2022 = vpack.c.b16 %v1995, %v1994
  %v2023 = vpack.c.b16 %v1997, %v1996
  %v2024 = vpack.c.b16 %v1999, %v1998
  %vm2050 = vcmask 130048
  %v2052 = vsel %vm2050, %v1842, 0
  %2054 = vmatprep.subr.bf16.mxu0 0
  %2055 = vmatpush1.bf16.msra.mxu0 %v2000
  %2056 = vmatprep.subr.bf16.mxu0 0
  %2057 = vmatpush1.bf16.msra.mxu0 %v2001
  %2058 = vmatprep.subr.bf16.mxu0 0
  %2059 = vmatpush1.bf16.msra.mxu0 %v2002
  %2060 = vmatprep.subr.bf16.mxu0 0
  %2061 = vmatpush1.bf16.msra.mxu0 %v2003
  %2062 = vmatprep.subr.bf16.mxu0 0
  %2063 = vmatpush1.bf16.msra.mxu0 %v2004
  %2064 = vmatprep.subr.bf16.mxu0 0
  %2065 = vmatpush1.bf16.msra.mxu0 %v2005
  %2066 = vmatprep.subr.bf16.mxu0 0
  %2067 = vmatpush1.bf16.msra.mxu0 %v2006
  %2068 = vmatprep.subr.bf16.mxu0 0
  %2069 = vmatpush1.bf16.msra.mxu0 %v2007
  %2070 = vmatprep.subr.bf16.mxu0 0
  %2071 = vmatpush1.bf16.msra.mxu0 %v2008
  %2072 = vmatprep.subr.bf16.mxu0 0
  %2073 = vmatpush1.bf16.msra.mxu0 %v2009
  %2074 = vmatprep.subr.bf16.mxu0 0
  %2075 = vmatpush1.bf16.msra.mxu0 %v2010
  %2076 = vmatprep.subr.bf16.mxu0 0
  %2077 = vmatpush1.bf16.msra.mxu0 %v2011
  %2078 = vmatprep.subr.bf16.mxu0 0
  %2079 = vmatpush1.bf16.msra.mxu0 %v2012
  %2080 = vmatprep.subr.bf16.mxu0 0
  %2081 = vmatpush1.bf16.msra.mxu0 %v2013
  %2082 = vmatprep.subr.bf16.mxu0 0
  %2083 = vmatpush1.bf16.msra.mxu0 %v2014
  %2084 = vmatprep.subr.bf16.mxu0 0
  %2085 = vmatpush1.bf16.msra.mxu0 %v2015
  %2086 = vmatprep.mubr.bf16.mxu0 %v1840
  %2087 = vmatmul.mubr.bf16.gmra.mrb[0].mxu0 %v1839
  %v2088 = vpop.f32.mrb[0].mxu0
  %v2089 = vadd.f32 %v1898, %v2088
  %v2090 = vpop.f32.mrb[0].mxu0
  %v2091 = vpop.f32.mrb[0].mxu0
  %v2092 = vpop.f32.mrb[0].mxu0
  %2093 = vdwg.mxu0
  %2094 = vmatprep.subr.bf16.mxu0 0
  %2095 = vmatpush1.bf16.msra.mxu0 %v2016
  %2096 = vmatprep.subr.bf16.mxu0 0
  %2097 = vmatpush1.bf16.msra.mxu0 %v2017
  %2098 = vmatprep.subr.bf16.mxu0 0
  %2099 = vmatpush1.bf16.msra.mxu0 %v2018
  %2100 = vmatprep.subr.bf16.mxu0 0
  %2101 = vmatpush1.bf16.msra.mxu0 %v2019
  %2102 = vmatprep.subr.bf16.mxu0 0
  %2103 = vmatpush1.bf16.msra.mxu0 %v2020
  %2104 = vmatprep.subr.bf16.mxu0 0
  %2105 = vmatpush1.bf16.msra.mxu0 %v2021
  %2106 = vmatprep.subr.bf16.mxu0 0
  %2107 = vmatpush1.bf16.msra.mxu0 %v2022
  %2108 = vmatprep.subr.bf16.mxu0 0
  %2109 = vmatpush1.bf16.msra.mxu0 %v2023
  %2110 = vmatprep.subr.bf16.mxu0 0
  %2111 = vmatpush1.bf16.msra.mxu0 %v2024
  %2112 = vmatprep.subr.bf16.mxu0 0
  %2113 = vmatpush1.bf16.msra.mxu0 0
  %2114 = vmatprep.subr.bf16.mxu0 0
  %2115 = vmatpush1.bf16.msra.mxu0 0
  %2116 = vmatprep.subr.bf16.mxu0 0
  %2117 = vmatpush1.bf16.msra.mxu0 0
  %2118 = vmatprep.subr.bf16.mxu0 0
  %2119 = vmatpush1.bf16.msra.mxu0 0
  %2120 = vmatprep.subr.bf16.mxu0 0
  %2121 = vmatpush1.bf16.msra.mxu0 0
  %2122 = vmatprep.subr.bf16.mxu0 0
  %2123 = vmatpush1.bf16.msra.mxu0 0
  %2124 = vmatprep.subr.bf16.mxu0 0
  %2125 = vmatpush1.bf16.msra.mxu0 0
  %2126 = vmatprep.mubr.bf16.mxu0 %v2052
  %2127 = vmatmul.mubr.bf16.gmra.mrb[0].mxu0 %v1841
  %v2128 = vpop.f32.mrb[0].mxu0
  %v2129 = vadd.f32 %v2089, %v2128
  %v2130 = vpop.f32.mrb[0].mxu0
  %v2131 = vpop.f32.mrb[0].mxu0
  %v2132 = vpop.f32.mrb[0].mxu0
  %2133 = vdwg.mxu0
  %v2134 = vmax.f32 %v2129, 0.0
  %v2135 = vpack.c.bf16 %v2134, %v2134
  %v2136 = vld [vmem:[%s7] sm:$0xf]
  %v2137 = vld [vmem:[%s7 + $0x4] sm:$0xf]
  %v2138 = vld [vmem:[%s7 + $0x8] sm:$0xf]
  %v2139 = vld [vmem:[%s7 + $0xc] sm:$0xf]
  %v2140 = vld [vmem:[%s7 + $0x10] sm:$0xf]
  %v2141 = vld [vmem:[%s7 + $0x14] sm:$0xf]
  %v2142 = vld [vmem:[%s7 + $0x18] sm:$0xf]
  %v2143 = vld [vmem:[%s7 + $0x1c] sm:$0xf]
  %v2144 = vld [vmem:[%s7 + $0x20] sm:$0xf]
  %v2145 = vld [vmem:[%s7 + $0x24] sm:$0xf]
  %v2146 = vld [vmem:[%s7 + $0x28] sm:$0xf]
  %v2147 = vld [vmem:[%s7 + $0x2c] sm:$0xf]
  %v2148 = vld [vmem:[%s7 + $0x30] sm:$0xf]
  %v2149 = vld [vmem:[%s7 + $0x34] sm:$0xf]
  %v2150 = vld [vmem:[%s7 + $0x38] sm:$0xf]
  %v2151 = vld [vmem:[%s7 + $0x3c] sm:$0xf]
  %v2152 = vld [vmem:[%s8] sm:$0x1]
  %v2154 = vlaneseq
  %v2155 = vshrl.u32 %v2154, 7
  %v2156 = vsub.s32 0, %v2155
  %v2157 = vrot.slane %v2152, %v2156
  %v2175 = vunpack.c.l.b16 %v2136
  %v2176 = vunpack.c.l.b16 %v2137
  %v2177 = vunpack.c.l.b16 %v2138
  %v2178 = vunpack.c.l.b16 %v2139
  %v2179 = vunpack.c.l.b16 %v2140
  %v2180 = vunpack.c.l.b16 %v2141
  %v2181 = vunpack.c.l.b16 %v2142
  %v2182 = vunpack.c.l.b16 %v2143
  %v2183 = vunpack.c.l.b16 %v2144
  %v2184 = vunpack.c.l.b16 %v2145
  %v2185 = vunpack.c.l.b16 %v2146
  %v2186 = vunpack.c.l.b16 %v2147
  %v2187 = vunpack.c.l.b16 %v2148
  %v2188 = vunpack.c.l.b16 %v2149
  %v2189 = vunpack.c.l.b16 %v2150
  %v2190 = vunpack.c.l.b16 %v2151
  %v2191 = vpack.c.b16 %v2176, %v2175
  %v2192 = vpack.c.b16 %v2178, %v2177
  %v2193 = vpack.c.b16 %v2180, %v2179
  %v2194 = vpack.c.b16 %v2182, %v2181
  %v2195 = vpack.c.b16 %v2184, %v2183
  %v2196 = vpack.c.b16 %v2186, %v2185
  %v2197 = vpack.c.b16 %v2188, %v2187
  %v2198 = vpack.c.b16 %v2190, %v2189
  %2207 = vmatprep.subr.bf16.mxu0 0
  %2208 = vmatpush1.bf16.msra.mxu0 %v2191
  %2209 = vmatprep.subr.bf16.mxu0 0
  %2210 = vmatpush1.bf16.msra.mxu0 %v2192
  %2211 = vmatprep.subr.bf16.mxu0 0
  %2212 = vmatpush1.bf16.msra.mxu0 %v2193
  %2213 = vmatprep.subr.bf16.mxu0 0
  %2214 = vmatpush1.bf16.msra.mxu0 %v2194
  %2215 = vmatprep.subr.bf16.mxu0 0
  %2216 = vmatpush1.bf16.msra.mxu0 %v2195
  %2217 = vmatprep.subr.bf16.mxu0 0
  %2218 = vmatpush1.bf16.msra.mxu0 %v2196
  %2219 = vmatprep.subr.bf16.mxu0 0
  %2220 = vmatpush1.bf16.msra.mxu0 %v2197
  %2221 = vmatprep.subr.bf16.mxu0 0
  %2222 = vmatpush1.bf16.msra.mxu0 %v2198
  %2223 = vmatprep.subr.bf16.mxu0 0
  %2224 = vmatpush1.bf16.msra.mxu0 0
  %2225 = vmatprep.subr.bf16.mxu0 0
  %2226 = vmatpush1.bf16.msra.mxu0 0
  %2227 = vmatprep.subr.bf16.mxu0 0
  %2228 = vmatpush1.bf16.msra.mxu0 0
  %2229 = vmatprep.subr.bf16.mxu0 0
  %2230 = vmatpush1.bf16.msra.mxu0 0
  %2231 = vmatprep.subr.bf16.mxu0 0
  %2232 = vmatpush1.bf16.msra.mxu0 0
  %2233 = vmatprep.subr.bf16.mxu0 0
  %2234 = vmatpush1.bf16.msra.mxu0 0
  %2235 = vmatprep.subr.bf16.mxu0 0
  %2236 = vmatpush1.bf16.msra.mxu0 0
  %2237 = vmatprep.subr.bf16.mxu0 0
  %2238 = vmatpush1.bf16.msra.mxu0 0
  %2239 = vmatprep.mubr.bf16.mxu0 0
  %2240 = vmatmul.mubr.bf16.gmra.mrb[0].mxu0 %v2135
  %v2241 = vpop.f32.mrb[0].mxu0
  %v2242 = vadd.f32 %v2157, %v2241
  %v2243 = vpop.f32.mrb[0].mxu0
  %v2244 = vpop.f32.mrb[0].mxu0
  %v2245 = vpop.f32.mrb[0].mxu0
  %2246 = vdwg.mxu0
  %v2247 = vmax.f32 %v2242, 0.0
  %v2248 = vpack.c.bf16 %v2247, %v2247
  %v2249 = vld [vmem:[%s9] sm:$0xf]
  %v2250 = vld [vmem:[%s9 + $0x4] sm:$0xf]
  %v2251 = vld [vmem:[%s9 + $0x8] sm:$0xf]
  %v2252 = vld [vmem:[%s9 + $0xc] sm:$0xf]
  %v2253 = vld [vmem:[%s9 + $0x10] sm:$0xf]
  %v2254 = vld [vmem:[%s9 + $0x14] sm:$0xf]
  %v2255 = vld [vmem:[%s9 + $0x18] sm:$0xf]
  %v2256 = vld [vmem:[%s9 + $0x1c] sm:$0xf]
  %v2257 = vld [vmem:[%s9 + $0x20] sm:$0xf]
  %v2258 = vld [vmem:[%s9 + $0x24] sm:$0xf]
  %v2259 = vld [vmem:[%s9 + $0x28] sm:$0xf]
  %v2260 = vld [vmem:[%s9 + $0x2c] sm:$0xf]
  %v2261 = vld [vmem:[%s9 + $0x30] sm:$0xf]
  %v2262 = vld [vmem:[%s9 + $0x34] sm:$0xf]
  %v2263 = vld [vmem:[%s9 + $0x38] sm:$0xf]
  %v2264 = vld [vmem:[%s9 + $0x3c] sm:$0xf]
  %v2265 = vld [vmem:[%s10] sm:$0x1]
  %v2267 = vlaneseq
  %v2268 = vshrl.u32 %v2267, 7
  %v2269 = vsub.s32 0, %v2268
  %v2270 = vrot.slane %v2265, %v2269
  %v2288 = vunpack.c.l.b16 %v2249
  %v2289 = vunpack.c.l.b16 %v2250
  %v2290 = vunpack.c.l.b16 %v2251
  %v2291 = vunpack.c.l.b16 %v2252
  %v2292 = vunpack.c.l.b16 %v2253
  %v2293 = vunpack.c.l.b16 %v2254
  %v2294 = vunpack.c.l.b16 %v2255
  %v2295 = vunpack.c.l.b16 %v2256
  %v2296 = vunpack.c.l.b16 %v2257
  %v2297 = vunpack.c.l.b16 %v2258
  %v2298 = vunpack.c.l.b16 %v2259
  %v2299 = vunpack.c.l.b16 %v2260
  %v2300 = vunpack.c.l.b16 %v2261
  %v2301 = vunpack.c.l.b16 %v2262
  %v2302 = vunpack.c.l.b16 %v2263
  %v2303 = vunpack.c.l.b16 %v2264
  %v2304 = vpack.c.b16 %v2289, %v2288
  %v2305 = vpack.c.b16 %v2291, %v2290
  %v2306 = vpack.c.b16 %v2293, %v2292
  %v2307 = vpack.c.b16 %v2295, %v2294
  %v2308 = vpack.c.b16 %v2297, %v2296
  %v2309 = vpack.c.b16 %v2299, %v2298
  %v2310 = vpack.c.b16 %v2301, %v2300
  %v2311 = vpack.c.b16 %v2303, %v2302
  %2320 = vmatprep.subr.bf16.mxu0 0
  %2321 = vmatpush1.bf16.msra.mxu0 %v2304
  %2322 = vmatprep.subr.bf16.mxu0 0
  %2323 = vmatpush1.bf16.msra.mxu0 %v2305
  %2324 = vmatprep.subr.bf16.mxu0 0
  %2325 = vmatpush1.bf16.msra.mxu0 %v2306
  %2326 = vmatprep.subr.bf16.mxu0 0
  %2327 = vmatpush1.bf16.msra.mxu0 %v2307
  %2328 = vmatprep.subr.bf16.mxu0 0
  %2329 = vmatpush1.bf16.msra.mxu0 %v2308
  %2330 = vmatprep.subr.bf16.mxu0 0
  %2331 = vmatpush1.bf16.msra.mxu0 %v2309
  %2332 = vmatprep.subr.bf16.mxu0 0
  %2333 = vmatpush1.bf16.msra.mxu0 %v2310
  %2334 = vmatprep.subr.bf16.mxu0 0
  %2335 = vmatpush1.bf16.msra.mxu0 %v2311
  %2336 = vmatprep.subr.bf16.mxu0 0
  %2337 = vmatpush1.bf16.msra.mxu0 0
  %2338 = vmatprep.subr.bf16.mxu0 0
  %2339 = vmatpush1.bf16.msra.mxu0 0
  %2340 = vmatprep.subr.bf16.mxu0 0
  %2341 = vmatpush1.bf16.msra.mxu0 0
  %2342 = vmatprep.subr.bf16.mxu0 0
  %2343 = vmatpush1.bf16.msra.mxu0 0
  %2344 = vmatprep.subr.bf16.mxu0 0
  %2345 = vmatpush1.bf16.msra.mxu0 0
  %2346 = vmatprep.subr.bf16.mxu0 0
  %2347 = vmatpush1.bf16.msra.mxu0 0
  %2348 = vmatprep.subr.bf16.mxu0 0
  %2349 = vmatpush1.bf16.msra.mxu0 0
  %2350 = vmatprep.subr.bf16.mxu0 0
  %2351 = vmatpush1.bf16.msra.mxu0 0
  %2352 = vmatprep.mubr.bf16.mxu0 0
  %2353 = vmatmul.mubr.bf16.gmra.mrb[0].mxu0 %v2248
  %v2354 = vpop.f32.mrb[0].mxu0
  %v2355 = vadd.f32 %v2270, %v2354
  %v2356 = vpop.f32.mrb[0].mxu0
  %v2357 = vpop.f32.mrb[0].mxu0
  %v2358 = vpop.f32.mrb[0].mxu0
  %2359 = vdwg.mxu0
  %vm2360 = vcmask 80896
  %2361 = vst.msk [vmem:[%s11] sm:$0xff] %vm2360, %v2355
  // Predicated region
  $region46: #{lenet_forward.1} parent=0 // pred_check
    _
  $region47: #{lenet_forward.1} parent=0 // pred_check_branch
    %2363 = sbr.rel (0) target = $region49
  $region48: #{lenet_forward.1} parent=0 // pred_region
    _
  $region49: #{lenet_forward.1} parent=0 // pred_fallthru
    _
  // Predicated region
  $region50: #{lenet_forward.1} parent=0 // pred_check
    _
  $region51: #{lenet_forward.1} parent=0 // pred_check_branch
    %2365 = sbr.rel (0) target = $region53
  $region52: #{lenet_forward.1} parent=0 // pred_region
    _
  $region53: #{lenet_forward.1} parent=0 // pred_fallthru
    _

</llo_original>
